<compile_context>
chip_gen: v7x
topology: tpu7x:2x2x1
jax: 0.10.0
libtpu: 0.0.40
codegen_flags: <defaults>
</compile_context>

<pallas_src>
import functools

import jax
import jax.numpy as jnp
from jax import lax
from jax.experimental import pallas as pl
from jax.experimental.pallas import tpu as pltpu


# ----------------------------- Pallas kernel --------------------------------

def _ptx_lstm_kernel(x_ref, w_ih_ref, w_hh_ref, b_ref, out_ref, *,
                     seq_len, hidden_dim, num_layers, k_tile):
    """Wavefront multi-layer LSTM over one K-tile of kernels.

    x_ref:    (seq_len * k_tile, d_max)  time-major rows: row = t * k_tile + k
    w_ih_ref: (num_layers, d_max, 4H)    transposed; rows >= in_dim are zero
    w_hh_ref: (num_layers, H, 4H)
    b_ref:    (num_layers, 1, 4H)        b_ih + b_hh
    out_ref:  (k_tile, H)                last-layer h at the last timestep
    """
    H = hidden_dim
    S = seq_len
    L = num_layers
    kt = k_tile
    G = 4 * H

    # Lane mask selecting the "g" (cell-candidate) gate columns.  Hoisted once
    # (JAX does not CSE broadcast_in_dim).
    lane = lax.broadcasted_iota(jnp.int32, (kt, G), 1)
    g_mask = (lane >= 2 * H) & (lane < 3 * H)

    def gates_to_hc(gates, c):
        # Single-tanh activation: sigmoid(x) = 0.5 * (1 + tanh(x / 2)).
        y = jnp.where(g_mask, gates, 0.5 * gates)
        t = jnp.tanh(y)
        act = jnp.where(g_mask, t, 0.5 * t + 0.5)
        i = act[:, 0 * H:1 * H]
        f = act[:, 1 * H:2 * H]
        g = act[:, 2 * H:3 * H]
        o = act[:, 3 * H:4 * H]
        c_new = f * c + i * g
        h_new = o * jnp.tanh(c_new)
        return h_new, c_new

    # --- hoisted, off the recurrent chain ------------------------------------
    # Layer-0 input projection for ALL timesteps in one matmul (bf16 operands,
    # f32 accumulation), bias folded in.
    xb = x_ref[...].astype(jnp.bfloat16)                         # (S*kt, d_max)
    w_ih0_bf = w_ih_ref[0].astype(jnp.bfloat16)                  # (d_max, 4H)
    gates_x0 = jnp.dot(xb, w_ih0_bf,
                       preferred_element_type=jnp.float32) + b_ref[0]
    # TODO(synk): if H or k_tile are scaled up, stream gates_x0 from a VMEM
    # scratch per timestep instead of holding it live across the unrolled loop.

    w_hh0_bf = w_hh_ref[0].astype(jnp.bfloat16)                  # (H, 4H)

    # Fused [W_ih ; W_hh] weights and biases for layers >= 1 (hoisted, bf16).
    comb_bf = [None]
    b_up = [None]
    for l in range(1, L):
        wcat = jnp.concatenate([w_ih_ref[l][:H, :], w_hh_ref[l]], axis=0)
        comb_bf.append(wcat.astype(jnp.bfloat16))                # (2H, 4H)
        b_up.append(b_ref[l])                                    # (1, 4H)

    # --- wavefront-unrolled recurrence ---------------------------------------
    zeros = jnp.zeros((kt, H), jnp.float32)
    hs = [zeros] * L
    cs = [zeros] * L
    for wf in range(S + L - 1):                 # static unroll over wavefronts
        new_h = list(hs)
        new_c = list(cs)
        for l in range(L):                      # static unroll over layers
            t = wf - l
            if not (0 <= t < S):
                continue
            if l == 0:
                gx = gates_x0[t * kt:(t + 1) * kt, :]            # (kt, 4H)
                gates = gx + jnp.dot(hs[0].astype(jnp.bfloat16), w_hh0_bf,
                                     preferred_element_type=jnp.float32)
            else:
                # Fused input + recurrent projection: [h_{l-1}(t), h_l(t-1)].
                inp = jnp.concatenate([hs[l - 1], hs[l]], axis=1)
                gates = jnp.dot(inp.astype(jnp.bfloat16), comb_bf[l],
                                preferred_element_type=jnp.float32) + b_up[l]
            new_h[l], new_c[l] = gates_to_hc(gates, cs[l])
        hs, cs = new_h, new_c

    out_ref[...] = hs[L - 1]


def ptx_encoder_pallas(x_padded, w_ih_t, w_hh_t, b, *, hidden_dim, num_layers,
                       k_tile=None):
    """x_padded: (num_kernels, seq_len, d_max) f32. Returns (hidden_dim,) f32."""
    num_kernels, seq_len, d_max = x_padded.shape

    if k_tile is None:
        # Batch as many sequences as possible into one tile (flat MXU cost up
        # to ~256 rows); tile only when K gets large.
        k_tile = max(8, min(256, ((num_kernels + 7) // 8) * 8))
    assert k_tile % 8 == 0
    k_pad = ((num_kernels + k_tile - 1) // k_tile) * k_tile
    n_tiles = k_pad // k_tile

    # Time-major within each K-tile: tile layout (n_tiles, S*k_tile, d_max),
    # row inside a tile = t * k_tile + k_local.
    x_t = jnp.swapaxes(x_padded, 0, 1)                          # (S, K, d_max)
    x_t = jnp.pad(x_t, ((0, 0), (0, k_pad - num_kernels), (0, 0)))
    x_tiles = x_t.reshape(seq_len, n_tiles, k_tile, d_max)
    x_tiles = jnp.transpose(x_tiles, (1, 0, 2, 3)).reshape(
        n_tiles, seq_len * k_tile, d_max).astype(jnp.float32)

    kernel = functools.partial(
        _ptx_lstm_kernel, seq_len=seq_len, hidden_dim=hidden_dim,
        num_layers=num_layers, k_tile=k_tile)

    G = 4 * hidden_dim
    h_last = pl.pallas_call(
        kernel,
        out_shape=jax.ShapeDtypeStruct((k_pad, hidden_dim), jnp.float32),
        grid=(n_tiles,),
        in_specs=[
            pl.BlockSpec((None, seq_len * k_tile, d_max), lambda i: (i, 0, 0)),
            pl.BlockSpec((num_layers, d_max, G), lambda i: (0, 0, 0)),
            pl.BlockSpec((num_layers, hidden_dim, G), lambda i: (0, 0, 0)),
            pl.BlockSpec((num_layers, 1, G), lambda i: (0, 0, 0)),
        ],
        out_specs=pl.BlockSpec((k_tile, hidden_dim), lambda i: (i, 0)),
        compiler_params=pltpu.CompilerParams(
            dimension_semantics=("parallel",)),
    )(x_tiles, w_ih_t, w_hh_t, b)

    # Mean over real kernels only (pad rows discarded).
    return jnp.mean(h_last[:num_kernels], axis=0)


# ------------------------------- JAX glue ------------------------------------

def init_params(key, vocab_sizes, embedding_dim, numerical_dim, hidden_dim,
                num_layers):
    H = hidden_dim
    input_size = len(vocab_sizes) * embedding_dim + numerical_dim
    k_scale = 1.0 / jnp.sqrt(jnp.float32(H))
    keys = jax.random.split(key, len(vocab_sizes) + 4 * num_layers)

    emb_tables = [jax.random.normal(keys[i], (v, embedding_dim), jnp.float32)
                  for i, v in enumerate(vocab_sizes)]

    lstm_params = []
    off = len(vocab_sizes)
    for layer in range(num_layers):
        in_dim = input_size if layer == 0 else H
        w_ih = jax.random.uniform(keys[off + 4 * layer + 0], (4 * H, in_dim),
                                  jnp.float32, -k_scale, k_scale)
        w_hh = jax.random.uniform(keys[off + 4 * layer + 1], (4 * H, H),
                                  jnp.float32, -k_scale, k_scale)
        b_ih = jax.random.uniform(keys[off + 4 * layer + 2], (4 * H,),
                                  jnp.float32, -k_scale, k_scale)
        b_hh = jax.random.uniform(keys[off + 4 * layer + 3], (4 * H,),
                                  jnp.float32, -k_scale, k_scale)
        lstm_params.append((w_ih, w_hh, b_ih, b_hh))
    return emb_tables, lstm_params, input_size


def build_lstm_inputs(categorical_kernels, numerical_kernels, emb_tables, d_max):
    """Embedding lookup + concat + zero-pad to d_max. Returns (K, S, d_max)."""
    rows = []
    for cat, num in zip(categorical_kernels, numerical_kernels):
        feats = [emb_tables[i][cat[:, i]] for i in range(len(emb_tables))]
        x = jnp.concatenate(feats + [num], axis=-1)      # (seq_len, input_size)
        pad = d_max - x.shape[-1]
        if pad > 0:
            x = jnp.pad(x, ((0, 0), (0, pad)))
        rows.append(x)
    # TODO(synk): assumes all kernels share seq_len so they can be stacked;
    # ragged seq_len would need per-kernel masking or separate calls.
    return jnp.stack(rows, axis=0).astype(jnp.float32)


def pack_lstm_weights(lstm_params, d_max, hidden_dim, num_layers):
    H = hidden_dim
    w_ih_t = jnp.zeros((num_layers, d_max, 4 * H), jnp.float32)
    w_hh_t = jnp.zeros((num_layers, H, 4 * H), jnp.float32)
    b = jnp.zeros((num_layers, 1, 4 * H), jnp.float32)
    for layer, (w_ih, w_hh, b_ih, b_hh) in enumerate(lstm_params):
        in_dim = w_ih.shape[1]
        # Rows in_dim:d_max stay zero; layer-0 pad columns of x are zero and
        # layers > 0 only read the first H rows.
        w_ih_t = w_ih_t.at[layer, :in_dim, :].set(w_ih.T)
        w_hh_t = w_hh_t.at[layer].set(w_hh.T)
        b = b.at[layer, 0].set(b_ih + b_hh)
    return w_ih_t, w_hh_t, b


# --------------------------- pure-JAX reference ------------------------------

def ptx_encoder_ref(categorical_kernels, numerical_kernels, emb_tables,
                    lstm_params, hidden_dim, num_layers):
    H = hidden_dim
    vecs = []
    for cat, num in zip(categorical_kernels, numerical_kernels):
        feats = [emb_tables[i][cat[:, i]] for i in range(len(emb_tables))]
        seq = jnp.concatenate(feats + [num], axis=-1)
        h_last = None
        for layer in range(num_layers):
            w_ih, w_hh, b_ih, b_hh = lstm_params[layer]
            h = jnp.zeros((H,), jnp.float32)
            c = jnp.zeros((H,), jnp.float32)
            outs = []
            for t in range(seq.shape[0]):
                gates = seq[t] @ w_ih.T + h @ w_hh.T + b_ih + b_hh
                i = jax.nn.sigmoid(gates[0 * H:1 * H])
                f = jax.nn.sigmoid(gates[1 * H:2 * H])
                g = jnp.tanh(gates[2 * H:3 * H])
                o = jax.nn.sigmoid(gates[3 * H:4 * H])
                c = f * c + i * g
                h = o * jnp.tanh(c)
                outs.append(h)
            seq = jnp.stack(outs, axis=0)
            h_last = h
        vecs.append(h_last)
    return jnp.mean(jnp.stack(vecs, axis=0), axis=0)


# ---------------------------------- main -------------------------------------

if __name__ == "__main__":
    # Config (small, consistent with the module's constructor).
    vocab_sizes = [11, 13, 7]
    embedding_dim = 8
    numerical_dim = 4
    hidden_dim = 32
    num_layers = 2
    # TODO(synk): nn.LSTM inter-layer dropout is a training-time op; this kernel
    # uses inference semantics (dropout = identity).
    dropout_prob = 0.1  # unused (inference)

    num_kernels = 10
    seq_len = 8

    key = jax.random.PRNGKey(0)
    k_param, k_data = jax.random.split(key)
    emb_tables, lstm_params, input_size = init_params(
        k_param, vocab_sizes, embedding_dim, numerical_dim, hidden_dim,
        num_layers)
    d_max = max(input_size, hidden_dim)

    # Deterministic synthetic inputs: per-kernel (seq_len, num_cat) int indices
    # and (seq_len, numerical_dim) float features.
    data_keys = jax.random.split(k_data, 2 * num_kernels)
    categorical_kernels = []
    numerical_kernels = []
    for k in range(num_kernels):
        cat_cols = [
            jax.random.randint(jax.random.fold_in(data_keys[2 * k], i),
                               (seq_len, 1), 0, vocab_sizes[i])
            for i in range(len(vocab_sizes))
        ]
        categorical_kernels.append(jnp.concatenate(cat_cols, axis=-1))
        numerical_kernels.append(
            jax.random.normal(data_keys[2 * k + 1], (seq_len, numerical_dim),
                              jnp.float32))

    # Glue: embeddings + concat + pad, pack weights.
    x_padded = build_lstm_inputs(categorical_kernels, numerical_kernels,
                                 emb_tables, d_max)
    w_ih_t, w_hh_t, b = pack_lstm_weights(lstm_params, d_max, hidden_dim,
                                          num_layers)

    # Pallas kernel (k_tile=8 -> 2-tile "parallel" grid at this size).
    out = ptx_encoder_pallas(x_padded, w_ih_t, w_hh_t, b,
                             hidden_dim=hidden_dim, num_layers=num_layers,
                             k_tile=8)
    out = jax.block_until_ready(out)

    # Pure-JAX f32 reference check.  MXU operands are bf16 (f32 accumulation),
    # so the tolerance is set at the bf16-operand error level (~1e-2).
    ref = ptx_encoder_ref(categorical_kernels, numerical_kernels, emb_tables,
                          lstm_params, hidden_dim, num_layers)
    ref = jax.block_until_ready(ref)

    assert out.shape == (hidden_dim,)
    assert jnp.allclose(out, ref, atol=3e-2, rtol=3e-2), (
        f"mismatch: max abs err {jnp.max(jnp.abs(out - ref))}")
    print("KERNEL_OK")
</pallas_src>

<mosaic_0001>
module attributes {stable_mosaic.version = 11 : i64} {
  func.func @_ptx_lstm_kernel(%arg0: i32, %arg1: memref<1x64x32xf32, #tpu.memory_space<vmem>>, %arg2: memref<2x32x128xf32, #tpu.memory_space<vmem>>, %arg3: memref<2x32x128xf32, #tpu.memory_space<vmem>>, %arg4: memref<2x1x128xf32, #tpu.memory_space<vmem>>, %arg5: memref<8x32xf32, #tpu.memory_space<vmem>>) attributes {dimension_semantics = [#tpu.dimension_semantics<parallel>], iteration_bounds = array<i64: 2>, scalar_prefetch = 0 : i64, scratch_operands = 0 : i64, tpu.core_type = #tpu.core_type<tc>, window_params = [{transform_indices = @transform_0, window_bounds = array<i64: 1, 64, 32>}, {pipeline_mode = #tpu.pipeline_mode<synchronous>, transform_indices = @transform_1, window_bounds = array<i64: 2, 32, 128>}, {pipeline_mode = #tpu.pipeline_mode<synchronous>, transform_indices = @transform_2, window_bounds = array<i64: 2, 32, 128>}, {pipeline_mode = #tpu.pipeline_mode<synchronous>, transform_indices = @transform_3, window_bounds = array<i64: 2, 1, 128>}, {transform_indices = @transform_4, window_bounds = array<i64: 8, 32>}]} {
    %0 = tpu.iota {dimensions = array<i32: 1>} : vector<8x128xi32>
    %c64_i32 = arith.constant 64 : i32
    %1 = vector.broadcast %c64_i32 : i32 to vector<8x128xi32>
    %2 = arith.cmpi sge, %0, %1 : vector<8x128xi32>
    %c96_i32 = arith.constant 96 : i32
    %3 = vector.broadcast %c96_i32 : i32 to vector<8x128xi32>
    %4 = arith.cmpi slt, %0, %3 : vector<8x128xi32>
    %5 = arith.andi %2, %4 : vector<8x128xi1>
    %c0 = arith.constant 0 : index
    %c0_0 = arith.constant 0 : index
    %c0_1 = arith.constant 0 : index
    %6 = vector.load %arg1[%c0, %c0_0, %c0_1] : memref<1x64x32xf32, #tpu.memory_space<vmem>>, vector<1x64x32xf32>
    %7 = vector.shape_cast %6 : vector<1x64x32xf32> to vector<64x32xf32>
    %8 = arith.truncf %7 : vector<64x32xf32> to vector<64x32xbf16>
    %c0_2 = arith.constant 0 : index
    %c0_3 = arith.constant 0 : index
    %c0_4 = arith.constant 0 : index
    %9 = vector.load %arg2[%c0_2, %c0_3, %c0_4] : memref<2x32x128xf32, #tpu.memory_space<vmem>>, vector<1x32x128xf32>
    %10 = vector.shape_cast %9 : vector<1x32x128xf32> to vector<32x128xf32>
    %11 = arith.truncf %10 : vector<32x128xf32> to vector<32x128xbf16>
    %cst = arith.constant dense<0.000000e+00> : vector<64x128xf32>
    %12 = tpu.matmul %8, %11, %cst {dimension_numbers = #tpu.dot_dimension_numbers<[1], [0], [0], [1], [0, 0, 1, 1], [], []>} : vector<64x32xbf16>, vector<32x128xbf16>, vector<64x128xf32> -> vector<64x128xf32>
    %c0_5 = arith.constant 0 : index
    %c0_6 = arith.constant 0 : index
    %c0_7 = arith.constant 0 : index
    %13 = vector.load %arg4[%c0_5, %c0_6, %c0_7] : memref<2x1x128xf32, #tpu.memory_space<vmem>>, vector<1x1x128xf32>
    %14 = vector.shape_cast %13 : vector<1x1x128xf32> to vector<1x128xf32>
    %15 = vector.broadcast %14 : vector<1x128xf32> to vector<64x128xf32>
    %16 = arith.addf %12, %15 : vector<64x128xf32>
    %c0_8 = arith.constant 0 : index
    %c0_9 = arith.constant 0 : index
    %c0_10 = arith.constant 0 : index
    %17 = vector.load %arg3[%c0_8, %c0_9, %c0_10] : memref<2x32x128xf32, #tpu.memory_space<vmem>>, vector<1x32x128xf32>
    %18 = vector.shape_cast %17 : vector<1x32x128xf32> to vector<32x128xf32>
    %19 = arith.truncf %18 : vector<32x128xf32> to vector<32x128xbf16>
    %c1 = arith.constant 1 : index
    %c0_11 = arith.constant 0 : index
    %c0_12 = arith.constant 0 : index
    %20 = vector.load %arg2[%c1, %c0_11, %c0_12] : memref<2x32x128xf32, #tpu.memory_space<vmem>>, vector<1x32x128xf32>
    %21 = vector.shape_cast %20 : vector<1x32x128xf32> to vector<32x128xf32>
    %c1_13 = arith.constant 1 : index
    %c0_14 = arith.constant 0 : index
    %c0_15 = arith.constant 0 : index
    %22 = vector.load %arg3[%c1_13, %c0_14, %c0_15] : memref<2x32x128xf32, #tpu.memory_space<vmem>>, vector<1x32x128xf32>
    %23 = vector.shape_cast %22 : vector<1x32x128xf32> to vector<32x128xf32>
    %24 = tpu.concatenate %21, %23 in 0 : vector<32x128xf32>, vector<32x128xf32> -> vector<64x128xf32>
    %25 = arith.truncf %24 : vector<64x128xf32> to vector<64x128xbf16>
    %c1_16 = arith.constant 1 : index
    %c0_17 = arith.constant 0 : index
    %c0_18 = arith.constant 0 : index
    %26 = vector.load %arg4[%c1_16, %c0_17, %c0_18] : memref<2x1x128xf32, #tpu.memory_space<vmem>>, vector<1x1x128xf32>
    %27 = vector.shape_cast %26 : vector<1x1x128xf32> to vector<1x128xf32>
    %cst_19 = arith.constant 0.000000e+00 : f32
    %28 = vector.broadcast %cst_19 : f32 to vector<8x32xf32>
    %29 = vector.extract_strided_slice %16 {offsets = [0, 0], sizes = [8, 128], strides = [1, 1]} : vector<64x128xf32> to vector<8x128xf32>
    %30 = arith.truncf %28 : vector<8x32xf32> to vector<8x32xbf16>
    %cst_20 = arith.constant dense<0.000000e+00> : vector<8x128xf32>
    %31 = tpu.matmul %30, %19, %cst_20 {dimension_numbers = #tpu.dot_dimension_numbers<[1], [0], [0], [1], [0, 0, 1, 1], [], []>} : vector<8x32xbf16>, vector<32x128xbf16>, vector<8x128xf32> -> vector<8x128xf32>
    %32 = arith.addf %29, %31 : vector<8x128xf32>
    %cst_21 = arith.constant 5.000000e-01 : f32
    %33 = vector.broadcast %cst_21 : f32 to vector<8x128xf32>
    %34 = arith.mulf %33, %32 : vector<8x128xf32>
    %35 = arith.select %5, %32, %34 : vector<8x128xi1>, vector<8x128xf32>
    %36 = math.tanh %35 : vector<8x128xf32>
    %cst_22 = arith.constant 5.000000e-01 : f32
    %37 = vector.broadcast %cst_22 : f32 to vector<8x128xf32>
    %38 = arith.mulf %37, %36 : vector<8x128xf32>
    %cst_23 = arith.constant 5.000000e-01 : f32
    %39 = vector.broadcast %cst_23 : f32 to vector<8x128xf32>
    %40 = arith.addf %38, %39 : vector<8x128xf32>
    %41 = arith.select %5, %36, %40 : vector<8x128xi1>, vector<8x128xf32>
    %42 = vector.extract_strided_slice %41 {offsets = [0, 0], sizes = [8, 32], strides = [1, 1]} : vector<8x128xf32> to vector<8x32xf32>
    %43 = vector.extract_strided_slice %41 {offsets = [0, 32], sizes = [8, 32], strides = [1, 1]} : vector<8x128xf32> to vector<8x32xf32>
    %44 = vector.extract_strided_slice %41 {offsets = [0, 64], sizes = [8, 32], strides = [1, 1]} : vector<8x128xf32> to vector<8x32xf32>
    %45 = vector.extract_strided_slice %41 {offsets = [0, 96], sizes = [8, 32], strides = [1, 1]} : vector<8x128xf32> to vector<8x32xf32>
    %46 = arith.mulf %43, %28 : vector<8x32xf32>
    %47 = arith.mulf %42, %44 : vector<8x32xf32>
    %48 = arith.addf %46, %47 : vector<8x32xf32>
    %49 = math.tanh %48 : vector<8x32xf32>
    %50 = arith.mulf %45, %49 : vector<8x32xf32>
    %51 = vector.extract_strided_slice %16 {offsets = [8, 0], sizes = [8, 128], strides = [1, 1]} : vector<64x128xf32> to vector<8x128xf32>
    %52 = arith.truncf %50 : vector<8x32xf32> to vector<8x32xbf16>
    %cst_24 = arith.constant dense<0.000000e+00> : vector<8x128xf32>
    %53 = tpu.matmul %52, %19, %cst_24 {dimension_numbers = #tpu.dot_dimension_numbers<[1], [0], [0], [1], [0, 0, 1, 1], [], []>} : vector<8x32xbf16>, vector<32x128xbf16>, vector<8x128xf32> -> vector<8x128xf32>
    %54 = arith.addf %51, %53 : vector<8x128xf32>
    %cst_25 = arith.constant 5.000000e-01 : f32
    %55 = vector.broadcast %cst_25 : f32 to vector<8x128xf32>
    %56 = arith.mulf %55, %54 : vector<8x128xf32>
    %57 = arith.select %5, %54, %56 : vector<8x128xi1>, vector<8x128xf32>
    %58 = math.tanh %57 : vector<8x128xf32>
    %cst_26 = arith.constant 5.000000e-01 : f32
    %59 = vector.broadcast %cst_26 : f32 to vector<8x128xf32>
    %60 = arith.mulf %59, %58 : vector<8x128xf32>
    %cst_27 = arith.constant 5.000000e-01 : f32
    %61 = vector.broadcast %cst_27 : f32 to vector<8x128xf32>
    %62 = arith.addf %60, %61 : vector<8x128xf32>
    %63 = arith.select %5, %58, %62 : vector<8x128xi1>, vector<8x128xf32>
    %64 = vector.extract_strided_slice %63 {offsets = [0, 0], sizes = [8, 32], strides = [1, 1]} : vector<8x128xf32> to vector<8x32xf32>
    %65 = vector.extract_strided_slice %63 {offsets = [0, 32], sizes = [8, 32], strides = [1, 1]} : vector<8x128xf32> to vector<8x32xf32>
    %66 = vector.extract_strided_slice %63 {offsets = [0, 64], sizes = [8, 32], strides = [1, 1]} : vector<8x128xf32> to vector<8x32xf32>
    %67 = vector.extract_strided_slice %63 {offsets = [0, 96], sizes = [8, 32], strides = [1, 1]} : vector<8x128xf32> to vector<8x32xf32>
    %68 = arith.mulf %65, %48 : vector<8x32xf32>
    %69 = arith.mulf %64, %66 : vector<8x32xf32>
    %70 = arith.addf %68, %69 : vector<8x32xf32>
    %71 = math.tanh %70 : vector<8x32xf32>
    %72 = arith.mulf %67, %71 : vector<8x32xf32>
    %73 = tpu.concatenate %50, %28 in 1 : vector<8x32xf32>, vector<8x32xf32> -> vector<8x64xf32>
    %74 = arith.truncf %73 : vector<8x64xf32> to vector<8x64xbf16>
    %cst_28 = arith.constant dense<0.000000e+00> : vector<8x128xf32>
    %75 = tpu.matmul %74, %25, %cst_28 {dimension_numbers = #tpu.dot_dimension_numbers<[1], [0], [0], [1], [0, 0, 1, 1], [], []>} : vector<8x64xbf16>, vector<64x128xbf16>, vector<8x128xf32> -> vector<8x128xf32>
    %76 = vector.broadcast %27 : vector<1x128xf32> to vector<8x128xf32>
    %77 = arith.addf %75, %76 : vector<8x128xf32>
    %cst_29 = arith.constant 5.000000e-01 : f32
    %78 = vector.broadcast %cst_29 : f32 to vector<8x128xf32>
    %79 = arith.mulf %78, %77 : vector<8x128xf32>
    %80 = arith.select %5, %77, %79 : vector<8x128xi1>, vector<8x128xf32>
    %81 = math.tanh %80 : vector<8x128xf32>
    %cst_30 = arith.constant 5.000000e-01 : f32
    %82 = vector.broadcast %cst_30 : f32 to vector<8x128xf32>
    %83 = arith.mulf %82, %81 : vector<8x128xf32>
    %cst_31 = arith.constant 5.000000e-01 : f32
    %84 = vector.broadcast %cst_31 : f32 to vector<8x128xf32>
    %85 = arith.addf %83, %84 : vector<8x128xf32>
    %86 = arith.select %5, %81, %85 : vector<8x128xi1>, vector<8x128xf32>
    %87 = vector.extract_strided_slice %86 {offsets = [0, 0], sizes = [8, 32], strides = [1, 1]} : vector<8x128xf32> to vector<8x32xf32>
    %88 = vector.extract_strided_slice %86 {offsets = [0, 32], sizes = [8, 32], strides = [1, 1]} : vector<8x128xf32> to vector<8x32xf32>
    %89 = vector.extract_strided_slice %86 {offsets = [0, 64], sizes = [8, 32], strides = [1, 1]} : vector<8x128xf32> to vector<8x32xf32>
    %90 = vector.extract_strided_slice %86 {offsets = [0, 96], sizes = [8, 32], strides = [1, 1]} : vector<8x128xf32> to vector<8x32xf32>
    %91 = arith.mulf %88, %28 : vector<8x32xf32>
    %92 = arith.mulf %87, %89 : vector<8x32xf32>
    %93 = arith.addf %91, %92 : vector<8x32xf32>
    %94 = math.tanh %93 : vector<8x32xf32>
    %95 = arith.mulf %90, %94 : vector<8x32xf32>
    %96 = vector.extract_strided_slice %16 {offsets = [16, 0], sizes = [8, 128], strides = [1, 1]} : vector<64x128xf32> to vector<8x128xf32>
    %97 = arith.truncf %72 : vector<8x32xf32> to vector<8x32xbf16>
    %cst_32 = arith.constant dense<0.000000e+00> : vector<8x128xf32>
    %98 = tpu.matmul %97, %19, %cst_32 {dimension_numbers = #tpu.dot_dimension_numbers<[1], [0], [0], [1], [0, 0, 1, 1], [], []>} : vector<8x32xbf16>, vector<32x128xbf16>, vector<8x128xf32> -> vector<8x128xf32>
    %99 = arith.addf %96, %98 : vector<8x128xf32>
    %cst_33 = arith.constant 5.000000e-01 : f32
    %100 = vector.broadcast %cst_33 : f32 to vector<8x128xf32>
    %101 = arith.mulf %100, %99 : vector<8x128xf32>
    %102 = arith.select %5, %99, %101 : vector<8x128xi1>, vector<8x128xf32>
    %103 = math.tanh %102 : vector<8x128xf32>
    %cst_34 = arith.constant 5.000000e-01 : f32
    %104 = vector.broadcast %cst_34 : f32 to vector<8x128xf32>
    %105 = arith.mulf %104, %103 : vector<8x128xf32>
    %cst_35 = arith.constant 5.000000e-01 : f32
    %106 = vector.broadcast %cst_35 : f32 to vector<8x128xf32>
    %107 = arith.addf %105, %106 : vector<8x128xf32>
    %108 = arith.select %5, %103, %107 : vector<8x128xi1>, vector<8x128xf32>
    %109 = vector.extract_strided_slice %108 {offsets = [0, 0], sizes = [8, 32], strides = [1, 1]} : vector<8x128xf32> to vector<8x32xf32>
    %110 = vector.extract_strided_slice %108 {offsets = [0, 32], sizes = [8, 32], strides = [1, 1]} : vector<8x128xf32> to vector<8x32xf32>
    %111 = vector.extract_strided_slice %108 {offsets = [0, 64], sizes = [8, 32], strides = [1, 1]} : vector<8x128xf32> to vector<8x32xf32>
    %112 = vector.extract_strided_slice %108 {offsets = [0, 96], sizes = [8, 32], strides = [1, 1]} : vector<8x128xf32> to vector<8x32xf32>
    %113 = arith.mulf %110, %70 : vector<8x32xf32>
    %114 = arith.mulf %109, %111 : vector<8x32xf32>
    %115 = arith.addf %113, %114 : vector<8x32xf32>
    %116 = math.tanh %115 : vector<8x32xf32>
    %117 = arith.mulf %112, %116 : vector<8x32xf32>
    %118 = tpu.concatenate %72, %95 in 1 : vector<8x32xf32>, vector<8x32xf32> -> vector<8x64xf32>
    %119 = arith.truncf %118 : vector<8x64xf32> to vector<8x64xbf16>
    %cst_36 = arith.constant dense<0.000000e+00> : vector<8x128xf32>
    %120 = tpu.matmul %119, %25, %cst_36 {dimension_numbers = #tpu.dot_dimension_numbers<[1], [0], [0], [1], [0, 0, 1, 1], [], []>} : vector<8x64xbf16>, vector<64x128xbf16>, vector<8x128xf32> -> vector<8x128xf32>
    %121 = vector.broadcast %27 : vector<1x128xf32> to vector<8x128xf32>
    %122 = arith.addf %120, %121 : vector<8x128xf32>
    %cst_37 = arith.constant 5.000000e-01 : f32
    %123 = vector.broadcast %cst_37 : f32 to vector<8x128xf32>
    %124 = arith.mulf %123, %122 : vector<8x128xf32>
    %125 = arith.select %5, %122, %124 : vector<8x128xi1>, vector<8x128xf32>
    %126 = math.tanh %125 : vector<8x128xf32>
    %cst_38 = arith.constant 5.000000e-01 : f32
    %127 = vector.broadcast %cst_38 : f32 to vector<8x128xf32>
    %128 = arith.mulf %127, %126 : vector<8x128xf32>
    %cst_39 = arith.constant 5.000000e-01 : f32
    %129 = vector.broadcast %cst_39 : f32 to vector<8x128xf32>
    %130 = arith.addf %128, %129 : vector<8x128xf32>
    %131 = arith.select %5, %126, %130 : vector<8x128xi1>, vector<8x128xf32>
    %132 = vector.extract_strided_slice %131 {offsets = [0, 0], sizes = [8, 32], strides = [1, 1]} : vector<8x128xf32> to vector<8x32xf32>
    %133 = vector.extract_strided_slice %131 {offsets = [0, 32], sizes = [8, 32], strides = [1, 1]} : vector<8x128xf32> to vector<8x32xf32>
    %134 = vector.extract_strided_slice %131 {offsets = [0, 64], sizes = [8, 32], strides = [1, 1]} : vector<8x128xf32> to vector<8x32xf32>
    %135 = vector.extract_strided_slice %131 {offsets = [0, 96], sizes = [8, 32], strides = [1, 1]} : vector<8x128xf32> to vector<8x32xf32>
    %136 = arith.mulf %133, %93 : vector<8x32xf32>
    %137 = arith.mulf %132, %134 : vector<8x32xf32>
    %138 = arith.addf %136, %137 : vector<8x32xf32>
    %139 = math.tanh %138 : vector<8x32xf32>
    %140 = arith.mulf %135, %139 : vector<8x32xf32>
    %141 = vector.extract_strided_slice %16 {offsets = [24, 0], sizes = [8, 128], strides = [1, 1]} : vector<64x128xf32> to vector<8x128xf32>
    %142 = arith.truncf %117 : vector<8x32xf32> to vector<8x32xbf16>
    %cst_40 = arith.constant dense<0.000000e+00> : vector<8x128xf32>
    %143 = tpu.matmul %142, %19, %cst_40 {dimension_numbers = #tpu.dot_dimension_numbers<[1], [0], [0], [1], [0, 0, 1, 1], [], []>} : vector<8x32xbf16>, vector<32x128xbf16>, vector<8x128xf32> -> vector<8x128xf32>
    %144 = arith.addf %141, %143 : vector<8x128xf32>
    %cst_41 = arith.constant 5.000000e-01 : f32
    %145 = vector.broadcast %cst_41 : f32 to vector<8x128xf32>
    %146 = arith.mulf %145, %144 : vector<8x128xf32>
    %147 = arith.select %5, %144, %146 : vector<8x128xi1>, vector<8x128xf32>
    %148 = math.tanh %147 : vector<8x128xf32>
    %cst_42 = arith.constant 5.000000e-01 : f32
    %149 = vector.broadcast %cst_42 : f32 to vector<8x128xf32>
    %150 = arith.mulf %149, %148 : vector<8x128xf32>
    %cst_43 = arith.constant 5.000000e-01 : f32
    %151 = vector.broadcast %cst_43 : f32 to vector<8x128xf32>
    %152 = arith.addf %150, %151 : vector<8x128xf32>
    %153 = arith.select %5, %148, %152 : vector<8x128xi1>, vector<8x128xf32>
    %154 = vector.extract_strided_slice %153 {offsets = [0, 0], sizes = [8, 32], strides = [1, 1]} : vector<8x128xf32> to vector<8x32xf32>
    %155 = vector.extract_strided_slice %153 {offsets = [0, 32], sizes = [8, 32], strides = [1, 1]} : vector<8x128xf32> to vector<8x32xf32>
    %156 = vector.extract_strided_slice %153 {offsets = [0, 64], sizes = [8, 32], strides = [1, 1]} : vector<8x128xf32> to vector<8x32xf32>
    %157 = vector.extract_strided_slice %153 {offsets = [0, 96], sizes = [8, 32], strides = [1, 1]} : vector<8x128xf32> to vector<8x32xf32>
    %158 = arith.mulf %155, %115 : vector<8x32xf32>
    %159 = arith.mulf %154, %156 : vector<8x32xf32>
    %160 = arith.addf %158, %159 : vector<8x32xf32>
    %161 = math.tanh %160 : vector<8x32xf32>
    %162 = arith.mulf %157, %161 : vector<8x32xf32>
    %163 = tpu.concatenate %117, %140 in 1 : vector<8x32xf32>, vector<8x32xf32> -> vector<8x64xf32>
    %164 = arith.truncf %163 : vector<8x64xf32> to vector<8x64xbf16>
    %cst_44 = arith.constant dense<0.000000e+00> : vector<8x128xf32>
    %165 = tpu.matmul %164, %25, %cst_44 {dimension_numbers = #tpu.dot_dimension_numbers<[1], [0], [0], [1], [0, 0, 1, 1], [], []>} : vector<8x64xbf16>, vector<64x128xbf16>, vector<8x128xf32> -> vector<8x128xf32>
    %166 = vector.broadcast %27 : vector<1x128xf32> to vector<8x128xf32>
    %167 = arith.addf %165, %166 : vector<8x128xf32>
    %cst_45 = arith.constant 5.000000e-01 : f32
    %168 = vector.broadcast %cst_45 : f32 to vector<8x128xf32>
    %169 = arith.mulf %168, %167 : vector<8x128xf32>
    %170 = arith.select %5, %167, %169 : vector<8x128xi1>, vector<8x128xf32>
    %171 = math.tanh %170 : vector<8x128xf32>
    %cst_46 = arith.constant 5.000000e-01 : f32
    %172 = vector.broadcast %cst_46 : f32 to vector<8x128xf32>
    %173 = arith.mulf %172, %171 : vector<8x128xf32>
    %cst_47 = arith.constant 5.000000e-01 : f32
    %174 = vector.broadcast %cst_47 : f32 to vector<8x128xf32>
    %175 = arith.addf %173, %174 : vector<8x128xf32>
    %176 = arith.select %5, %171, %175 : vector<8x128xi1>, vector<8x128xf32>
    %177 = vector.extract_strided_slice %176 {offsets = [0, 0], sizes = [8, 32], strides = [1, 1]} : vector<8x128xf32> to vector<8x32xf32>
    %178 = vector.extract_strided_slice %176 {offsets = [0, 32], sizes = [8, 32], strides = [1, 1]} : vector<8x128xf32> to vector<8x32xf32>
    %179 = vector.extract_strided_slice %176 {offsets = [0, 64], sizes = [8, 32], strides = [1, 1]} : vector<8x128xf32> to vector<8x32xf32>
    %180 = vector.extract_strided_slice %176 {offsets = [0, 96], sizes = [8, 32], strides = [1, 1]} : vector<8x128xf32> to vector<8x32xf32>
    %181 = arith.mulf %178, %138 : vector<8x32xf32>
    %182 = arith.mulf %177, %179 : vector<8x32xf32>
    %183 = arith.addf %181, %182 : vector<8x32xf32>
    %184 = math.tanh %183 : vector<8x32xf32>
    %185 = arith.mulf %180, %184 : vector<8x32xf32>
    %186 = vector.extract_strided_slice %16 {offsets = [32, 0], sizes = [8, 128], strides = [1, 1]} : vector<64x128xf32> to vector<8x128xf32>
    %187 = arith.truncf %162 : vector<8x32xf32> to vector<8x32xbf16>
    %cst_48 = arith.constant dense<0.000000e+00> : vector<8x128xf32>
    %188 = tpu.matmul %187, %19, %cst_48 {dimension_numbers = #tpu.dot_dimension_numbers<[1], [0], [0], [1], [0, 0, 1, 1], [], []>} : vector<8x32xbf16>, vector<32x128xbf16>, vector<8x128xf32> -> vector<8x128xf32>
    %189 = arith.addf %186, %188 : vector<8x128xf32>
    %cst_49 = arith.constant 5.000000e-01 : f32
    %190 = vector.broadcast %cst_49 : f32 to vector<8x128xf32>
    %191 = arith.mulf %190, %189 : vector<8x128xf32>
    %192 = arith.select %5, %189, %191 : vector<8x128xi1>, vector<8x128xf32>
    %193 = math.tanh %192 : vector<8x128xf32>
    %cst_50 = arith.constant 5.000000e-01 : f32
    %194 = vector.broadcast %cst_50 : f32 to vector<8x128xf32>
    %195 = arith.mulf %194, %193 : vector<8x128xf32>
    %cst_51 = arith.constant 5.000000e-01 : f32
    %196 = vector.broadcast %cst_51 : f32 to vector<8x128xf32>
    %197 = arith.addf %195, %196 : vector<8x128xf32>
    %198 = arith.select %5, %193, %197 : vector<8x128xi1>, vector<8x128xf32>
    %199 = vector.extract_strided_slice %198 {offsets = [0, 0], sizes = [8, 32], strides = [1, 1]} : vector<8x128xf32> to vector<8x32xf32>
    %200 = vector.extract_strided_slice %198 {offsets = [0, 32], sizes = [8, 32], strides = [1, 1]} : vector<8x128xf32> to vector<8x32xf32>
    %201 = vector.extract_strided_slice %198 {offsets = [0, 64], sizes = [8, 32], strides = [1, 1]} : vector<8x128xf32> to vector<8x32xf32>
    %202 = vector.extract_strided_slice %198 {offsets = [0, 96], sizes = [8, 32], strides = [1, 1]} : vector<8x128xf32> to vector<8x32xf32>
    %203 = arith.mulf %200, %160 : vector<8x32xf32>
    %204 = arith.mulf %199, %201 : vector<8x32xf32>
    %205 = arith.addf %203, %204 : vector<8x32xf32>
    %206 = math.tanh %205 : vector<8x32xf32>
    %207 = arith.mulf %202, %206 : vector<8x32xf32>
    %208 = tpu.concatenate %162, %185 in 1 : vector<8x32xf32>, vector<8x32xf32> -> vector<8x64xf32>
    %209 = arith.truncf %208 : vector<8x64xf32> to vector<8x64xbf16>
    %cst_52 = arith.constant dense<0.000000e+00> : vector<8x128xf32>
    %210 = tpu.matmul %209, %25, %cst_52 {dimension_numbers = #tpu.dot_dimension_numbers<[1], [0], [0], [1], [0, 0, 1, 1], [], []>} : vector<8x64xbf16>, vector<64x128xbf16>, vector<8x128xf32> -> vector<8x128xf32>
    %211 = vector.broadcast %27 : vector<1x128xf32> to vector<8x128xf32>
    %212 = arith.addf %210, %211 : vector<8x128xf32>
    %cst_53 = arith.constant 5.000000e-01 : f32
    %213 = vector.broadcast %cst_53 : f32 to vector<8x128xf32>
    %214 = arith.mulf %213, %212 : vector<8x128xf32>
    %215 = arith.select %5, %212, %214 : vector<8x128xi1>, vector<8x128xf32>
    %216 = math.tanh %215 : vector<8x128xf32>
    %cst_54 = arith.constant 5.000000e-01 : f32
    %217 = vector.broadcast %cst_54 : f32 to vector<8x128xf32>
    %218 = arith.mulf %217, %216 : vector<8x128xf32>
    %cst_55 = arith.constant 5.000000e-01 : f32
    %219 = vector.broadcast %cst_55 : f32 to vector<8x128xf32>
    %220 = arith.addf %218, %219 : vector<8x128xf32>
    %221 = arith.select %5, %216, %220 : vector<8x128xi1>, vector<8x128xf32>
    %222 = vector.extract_strided_slice %221 {offsets = [0, 0], sizes = [8, 32], strides = [1, 1]} : vector<8x128xf32> to vector<8x32xf32>
    %223 = vector.extract_strided_slice %221 {offsets = [0, 32], sizes = [8, 32], strides = [1, 1]} : vector<8x128xf32> to vector<8x32xf32>
    %224 = vector.extract_strided_slice %221 {offsets = [0, 64], sizes = [8, 32], strides = [1, 1]} : vector<8x128xf32> to vector<8x32xf32>
    %225 = vector.extract_strided_slice %221 {offsets = [0, 96], sizes = [8, 32], strides = [1, 1]} : vector<8x128xf32> to vector<8x32xf32>
    %226 = arith.mulf %223, %183 : vector<8x32xf32>
    %227 = arith.mulf %222, %224 : vector<8x32xf32>
    %228 = arith.addf %226, %227 : vector<8x32xf32>
    %229 = math.tanh %228 : vector<8x32xf32>
    %230 = arith.mulf %225, %229 : vector<8x32xf32>
    %231 = vector.extract_strided_slice %16 {offsets = [40, 0], sizes = [8, 128], strides = [1, 1]} : vector<64x128xf32> to vector<8x128xf32>
    %232 = arith.truncf %207 : vector<8x32xf32> to vector<8x32xbf16>
    %cst_56 = arith.constant dense<0.000000e+00> : vector<8x128xf32>
    %233 = tpu.matmul %232, %19, %cst_56 {dimension_numbers = #tpu.dot_dimension_numbers<[1], [0], [0], [1], [0, 0, 1, 1], [], []>} : vector<8x32xbf16>, vector<32x128xbf16>, vector<8x128xf32> -> vector<8x128xf32>
    %234 = arith.addf %231, %233 : vector<8x128xf32>
    %cst_57 = arith.constant 5.000000e-01 : f32
    %235 = vector.broadcast %cst_57 : f32 to vector<8x128xf32>
    %236 = arith.mulf %235, %234 : vector<8x128xf32>
    %237 = arith.select %5, %234, %236 : vector<8x128xi1>, vector<8x128xf32>
    %238 = math.tanh %237 : vector<8x128xf32>
    %cst_58 = arith.constant 5.000000e-01 : f32
    %239 = vector.broadcast %cst_58 : f32 to vector<8x128xf32>
    %240 = arith.mulf %239, %238 : vector<8x128xf32>
    %cst_59 = arith.constant 5.000000e-01 : f32
    %241 = vector.broadcast %cst_59 : f32 to vector<8x128xf32>
    %242 = arith.addf %240, %241 : vector<8x128xf32>
    %243 = arith.select %5, %238, %242 : vector<8x128xi1>, vector<8x128xf32>
    %244 = vector.extract_strided_slice %243 {offsets = [0, 0], sizes = [8, 32], strides = [1, 1]} : vector<8x128xf32> to vector<8x32xf32>
    %245 = vector.extract_strided_slice %243 {offsets = [0, 32], sizes = [8, 32], strides = [1, 1]} : vector<8x128xf32> to vector<8x32xf32>
    %246 = vector.extract_strided_slice %243 {offsets = [0, 64], sizes = [8, 32], strides = [1, 1]} : vector<8x128xf32> to vector<8x32xf32>
    %247 = vector.extract_strided_slice %243 {offsets = [0, 96], sizes = [8, 32], strides = [1, 1]} : vector<8x128xf32> to vector<8x32xf32>
    %248 = arith.mulf %245, %205 : vector<8x32xf32>
    %249 = arith.mulf %244, %246 : vector<8x32xf32>
    %250 = arith.addf %248, %249 : vector<8x32xf32>
    %251 = math.tanh %250 : vector<8x32xf32>
    %252 = arith.mulf %247, %251 : vector<8x32xf32>
    %253 = tpu.concatenate %207, %230 in 1 : vector<8x32xf32>, vector<8x32xf32> -> vector<8x64xf32>
    %254 = arith.truncf %253 : vector<8x64xf32> to vector<8x64xbf16>
    %cst_60 = arith.constant dense<0.000000e+00> : vector<8x128xf32>
    %255 = tpu.matmul %254, %25, %cst_60 {dimension_numbers = #tpu.dot_dimension_numbers<[1], [0], [0], [1], [0, 0, 1, 1], [], []>} : vector<8x64xbf16>, vector<64x128xbf16>, vector<8x128xf32> -> vector<8x128xf32>
    %256 = vector.broadcast %27 : vector<1x128xf32> to vector<8x128xf32>
    %257 = arith.addf %255, %256 : vector<8x128xf32>
    %cst_61 = arith.constant 5.000000e-01 : f32
    %258 = vector.broadcast %cst_61 : f32 to vector<8x128xf32>
    %259 = arith.mulf %258, %257 : vector<8x128xf32>
    %260 = arith.select %5, %257, %259 : vector<8x128xi1>, vector<8x128xf32>
    %261 = math.tanh %260 : vector<8x128xf32>
    %cst_62 = arith.constant 5.000000e-01 : f32
    %262 = vector.broadcast %cst_62 : f32 to vector<8x128xf32>
    %263 = arith.mulf %262, %261 : vector<8x128xf32>
    %cst_63 = arith.constant 5.000000e-01 : f32
    %264 = vector.broadcast %cst_63 : f32 to vector<8x128xf32>
    %265 = arith.addf %263, %264 : vector<8x128xf32>
    %266 = arith.select %5, %261, %265 : vector<8x128xi1>, vector<8x128xf32>
    %267 = vector.extract_strided_slice %266 {offsets = [0, 0], sizes = [8, 32], strides = [1, 1]} : vector<8x128xf32> to vector<8x32xf32>
    %268 = vector.extract_strided_slice %266 {offsets = [0, 32], sizes = [8, 32], strides = [1, 1]} : vector<8x128xf32> to vector<8x32xf32>
    %269 = vector.extract_strided_slice %266 {offsets = [0, 64], sizes = [8, 32], strides = [1, 1]} : vector<8x128xf32> to vector<8x32xf32>
    %270 = vector.extract_strided_slice %266 {offsets = [0, 96], sizes = [8, 32], strides = [1, 1]} : vector<8x128xf32> to vector<8x32xf32>
    %271 = arith.mulf %268, %228 : vector<8x32xf32>
    %272 = arith.mulf %267, %269 : vector<8x32xf32>
    %273 = arith.addf %271, %272 : vector<8x32xf32>
    %274 = math.tanh %273 : vector<8x32xf32>
    %275 = arith.mulf %270, %274 : vector<8x32xf32>
    %276 = vector.extract_strided_slice %16 {offsets = [48, 0], sizes = [8, 128], strides = [1, 1]} : vector<64x128xf32> to vector<8x128xf32>
    %277 = arith.truncf %252 : vector<8x32xf32> to vector<8x32xbf16>
    %cst_64 = arith.constant dense<0.000000e+00> : vector<8x128xf32>
    %278 = tpu.matmul %277, %19, %cst_64 {dimension_numbers = #tpu.dot_dimension_numbers<[1], [0], [0], [1], [0, 0, 1, 1], [], []>} : vector<8x32xbf16>, vector<32x128xbf16>, vector<8x128xf32> -> vector<8x128xf32>
    %279 = arith.addf %276, %278 : vector<8x128xf32>
    %cst_65 = arith.constant 5.000000e-01 : f32
    %280 = vector.broadcast %cst_65 : f32 to vector<8x128xf32>
    %281 = arith.mulf %280, %279 : vector<8x128xf32>
    %282 = arith.select %5, %279, %281 : vector<8x128xi1>, vector<8x128xf32>
    %283 = math.tanh %282 : vector<8x128xf32>
    %cst_66 = arith.constant 5.000000e-01 : f32
    %284 = vector.broadcast %cst_66 : f32 to vector<8x128xf32>
    %285 = arith.mulf %284, %283 : vector<8x128xf32>
    %cst_67 = arith.constant 5.000000e-01 : f32
    %286 = vector.broadcast %cst_67 : f32 to vector<8x128xf32>
    %287 = arith.addf %285, %286 : vector<8x128xf32>
    %288 = arith.select %5, %283, %287 : vector<8x128xi1>, vector<8x128xf32>
    %289 = vector.extract_strided_slice %288 {offsets = [0, 0], sizes = [8, 32], strides = [1, 1]} : vector<8x128xf32> to vector<8x32xf32>
    %290 = vector.extract_strided_slice %288 {offsets = [0, 32], sizes = [8, 32], strides = [1, 1]} : vector<8x128xf32> to vector<8x32xf32>
    %291 = vector.extract_strided_slice %288 {offsets = [0, 64], sizes = [8, 32], strides = [1, 1]} : vector<8x128xf32> to vector<8x32xf32>
    %292 = vector.extract_strided_slice %288 {offsets = [0, 96], sizes = [8, 32], strides = [1, 1]} : vector<8x128xf32> to vector<8x32xf32>
    %293 = arith.mulf %290, %250 : vector<8x32xf32>
    %294 = arith.mulf %289, %291 : vector<8x32xf32>
    %295 = arith.addf %293, %294 : vector<8x32xf32>
    %296 = math.tanh %295 : vector<8x32xf32>
    %297 = arith.mulf %292, %296 : vector<8x32xf32>
    %298 = tpu.concatenate %252, %275 in 1 : vector<8x32xf32>, vector<8x32xf32> -> vector<8x64xf32>
    %299 = arith.truncf %298 : vector<8x64xf32> to vector<8x64xbf16>
    %cst_68 = arith.constant dense<0.000000e+00> : vector<8x128xf32>
    %300 = tpu.matmul %299, %25, %cst_68 {dimension_numbers = #tpu.dot_dimension_numbers<[1], [0], [0], [1], [0, 0, 1, 1], [], []>} : vector<8x64xbf16>, vector<64x128xbf16>, vector<8x128xf32> -> vector<8x128xf32>
    %301 = vector.broadcast %27 : vector<1x128xf32> to vector<8x128xf32>
    %302 = arith.addf %300, %301 : vector<8x128xf32>
    %cst_69 = arith.constant 5.000000e-01 : f32
    %303 = vector.broadcast %cst_69 : f32 to vector<8x128xf32>
    %304 = arith.mulf %303, %302 : vector<8x128xf32>
    %305 = arith.select %5, %302, %304 : vector<8x128xi1>, vector<8x128xf32>
    %306 = math.tanh %305 : vector<8x128xf32>
    %cst_70 = arith.constant 5.000000e-01 : f32
    %307 = vector.broadcast %cst_70 : f32 to vector<8x128xf32>
    %308 = arith.mulf %307, %306 : vector<8x128xf32>
    %cst_71 = arith.constant 5.000000e-01 : f32
    %309 = vector.broadcast %cst_71 : f32 to vector<8x128xf32>
    %310 = arith.addf %308, %309 : vector<8x128xf32>
    %311 = arith.select %5, %306, %310 : vector<8x128xi1>, vector<8x128xf32>
    %312 = vector.extract_strided_slice %311 {offsets = [0, 0], sizes = [8, 32], strides = [1, 1]} : vector<8x128xf32> to vector<8x32xf32>
    %313 = vector.extract_strided_slice %311 {offsets = [0, 32], sizes = [8, 32], strides = [1, 1]} : vector<8x128xf32> to vector<8x32xf32>
    %314 = vector.extract_strided_slice %311 {offsets = [0, 64], sizes = [8, 32], strides = [1, 1]} : vector<8x128xf32> to vector<8x32xf32>
    %315 = vector.extract_strided_slice %311 {offsets = [0, 96], sizes = [8, 32], strides = [1, 1]} : vector<8x128xf32> to vector<8x32xf32>
    %316 = arith.mulf %313, %273 : vector<8x32xf32>
    %317 = arith.mulf %312, %314 : vector<8x32xf32>
    %318 = arith.addf %316, %317 : vector<8x32xf32>
    %319 = math.tanh %318 : vector<8x32xf32>
    %320 = arith.mulf %315, %319 : vector<8x32xf32>
    %321 = vector.extract_strided_slice %16 {offsets = [56, 0], sizes = [8, 128], strides = [1, 1]} : vector<64x128xf32> to vector<8x128xf32>
    %322 = arith.truncf %297 : vector<8x32xf32> to vector<8x32xbf16>
    %cst_72 = arith.constant dense<0.000000e+00> : vector<8x128xf32>
    %323 = tpu.matmul %322, %19, %cst_72 {dimension_numbers = #tpu.dot_dimension_numbers<[1], [0], [0], [1], [0, 0, 1, 1], [], []>} : vector<8x32xbf16>, vector<32x128xbf16>, vector<8x128xf32> -> vector<8x128xf32>
    %324 = arith.addf %321, %323 : vector<8x128xf32>
    %cst_73 = arith.constant 5.000000e-01 : f32
    %325 = vector.broadcast %cst_73 : f32 to vector<8x128xf32>
    %326 = arith.mulf %325, %324 : vector<8x128xf32>
    %327 = arith.select %5, %324, %326 : vector<8x128xi1>, vector<8x128xf32>
    %328 = math.tanh %327 : vector<8x128xf32>
    %cst_74 = arith.constant 5.000000e-01 : f32
    %329 = vector.broadcast %cst_74 : f32 to vector<8x128xf32>
    %330 = arith.mulf %329, %328 : vector<8x128xf32>
    %cst_75 = arith.constant 5.000000e-01 : f32
    %331 = vector.broadcast %cst_75 : f32 to vector<8x128xf32>
    %332 = arith.addf %330, %331 : vector<8x128xf32>
    %333 = arith.select %5, %328, %332 : vector<8x128xi1>, vector<8x128xf32>
    %334 = vector.extract_strided_slice %333 {offsets = [0, 0], sizes = [8, 32], strides = [1, 1]} : vector<8x128xf32> to vector<8x32xf32>
    %335 = vector.extract_strided_slice %333 {offsets = [0, 32], sizes = [8, 32], strides = [1, 1]} : vector<8x128xf32> to vector<8x32xf32>
    %336 = vector.extract_strided_slice %333 {offsets = [0, 64], sizes = [8, 32], strides = [1, 1]} : vector<8x128xf32> to vector<8x32xf32>
    %337 = vector.extract_strided_slice %333 {offsets = [0, 96], sizes = [8, 32], strides = [1, 1]} : vector<8x128xf32> to vector<8x32xf32>
    %338 = arith.mulf %335, %295 : vector<8x32xf32>
    %339 = arith.mulf %334, %336 : vector<8x32xf32>
    %340 = arith.addf %338, %339 : vector<8x32xf32>
    %341 = math.tanh %340 : vector<8x32xf32>
    %342 = arith.mulf %337, %341 : vector<8x32xf32>
    %343 = tpu.concatenate %297, %320 in 1 : vector<8x32xf32>, vector<8x32xf32> -> vector<8x64xf32>
    %344 = arith.truncf %343 : vector<8x64xf32> to vector<8x64xbf16>
    %cst_76 = arith.constant dense<0.000000e+00> : vector<8x128xf32>
    %345 = tpu.matmul %344, %25, %cst_76 {dimension_numbers = #tpu.dot_dimension_numbers<[1], [0], [0], [1], [0, 0, 1, 1], [], []>} : vector<8x64xbf16>, vector<64x128xbf16>, vector<8x128xf32> -> vector<8x128xf32>
    %346 = vector.broadcast %27 : vector<1x128xf32> to vector<8x128xf32>
    %347 = arith.addf %345, %346 : vector<8x128xf32>
    %cst_77 = arith.constant 5.000000e-01 : f32
    %348 = vector.broadcast %cst_77 : f32 to vector<8x128xf32>
    %349 = arith.mulf %348, %347 : vector<8x128xf32>
    %350 = arith.select %5, %347, %349 : vector<8x128xi1>, vector<8x128xf32>
    %351 = math.tanh %350 : vector<8x128xf32>
    %cst_78 = arith.constant 5.000000e-01 : f32
    %352 = vector.broadcast %cst_78 : f32 to vector<8x128xf32>
    %353 = arith.mulf %352, %351 : vector<8x128xf32>
    %cst_79 = arith.constant 5.000000e-01 : f32
    %354 = vector.broadcast %cst_79 : f32 to vector<8x128xf32>
    %355 = arith.addf %353, %354 : vector<8x128xf32>
    %356 = arith.select %5, %351, %355 : vector<8x128xi1>, vector<8x128xf32>
    %357 = vector.extract_strided_slice %356 {offsets = [0, 0], sizes = [8, 32], strides = [1, 1]} : vector<8x128xf32> to vector<8x32xf32>
    %358 = vector.extract_strided_slice %356 {offsets = [0, 32], sizes = [8, 32], strides = [1, 1]} : vector<8x128xf32> to vector<8x32xf32>
    %359 = vector.extract_strided_slice %356 {offsets = [0, 64], sizes = [8, 32], strides = [1, 1]} : vector<8x128xf32> to vector<8x32xf32>
    %360 = vector.extract_strided_slice %356 {offsets = [0, 96], sizes = [8, 32], strides = [1, 1]} : vector<8x128xf32> to vector<8x32xf32>
    %361 = arith.mulf %358, %318 : vector<8x32xf32>
    %362 = arith.mulf %357, %359 : vector<8x32xf32>
    %363 = arith.addf %361, %362 : vector<8x32xf32>
    %364 = math.tanh %363 : vector<8x32xf32>
    %365 = arith.mulf %360, %364 : vector<8x32xf32>
    %366 = tpu.concatenate %342, %365 in 1 : vector<8x32xf32>, vector<8x32xf32> -> vector<8x64xf32>
    %367 = arith.truncf %366 : vector<8x64xf32> to vector<8x64xbf16>
    %cst_80 = arith.constant dense<0.000000e+00> : vector<8x128xf32>
    %368 = tpu.matmul %367, %25, %cst_80 {dimension_numbers = #tpu.dot_dimension_numbers<[1], [0], [0], [1], [0, 0, 1, 1], [], []>} : vector<8x64xbf16>, vector<64x128xbf16>, vector<8x128xf32> -> vector<8x128xf32>
    %369 = vector.broadcast %27 : vector<1x128xf32> to vector<8x128xf32>
    %370 = arith.addf %368, %369 : vector<8x128xf32>
    %cst_81 = arith.constant 5.000000e-01 : f32
    %371 = vector.broadcast %cst_81 : f32 to vector<8x128xf32>
    %372 = arith.mulf %371, %370 : vector<8x128xf32>
    %373 = arith.select %5, %370, %372 : vector<8x128xi1>, vector<8x128xf32>
    %374 = math.tanh %373 : vector<8x128xf32>
    %cst_82 = arith.constant 5.000000e-01 : f32
    %375 = vector.broadcast %cst_82 : f32 to vector<8x128xf32>
    %376 = arith.mulf %375, %374 : vector<8x128xf32>
    %cst_83 = arith.constant 5.000000e-01 : f32
    %377 = vector.broadcast %cst_83 : f32 to vector<8x128xf32>
    %378 = arith.addf %376, %377 : vector<8x128xf32>
    %379 = arith.select %5, %374, %378 : vector<8x128xi1>, vector<8x128xf32>
    %380 = vector.extract_strided_slice %379 {offsets = [0, 0], sizes = [8, 32], strides = [1, 1]} : vector<8x128xf32> to vector<8x32xf32>
    %381 = vector.extract_strided_slice %379 {offsets = [0, 32], sizes = [8, 32], strides = [1, 1]} : vector<8x128xf32> to vector<8x32xf32>
    %382 = vector.extract_strided_slice %379 {offsets = [0, 64], sizes = [8, 32], strides = [1, 1]} : vector<8x128xf32> to vector<8x32xf32>
    %383 = vector.extract_strided_slice %379 {offsets = [0, 96], sizes = [8, 32], strides = [1, 1]} : vector<8x128xf32> to vector<8x32xf32>
    %384 = arith.mulf %381, %363 : vector<8x32xf32>
    %385 = arith.mulf %380, %382 : vector<8x32xf32>
    %386 = arith.addf %384, %385 : vector<8x32xf32>
    %387 = math.tanh %386 : vector<8x32xf32>
    %388 = arith.mulf %383, %387 : vector<8x32xf32>
    %c0_84 = arith.constant 0 : index
    %c0_85 = arith.constant 0 : index
    %389 = vector.load %arg5[%c0_84, %c0_85] : memref<8x32xf32, #tpu.memory_space<vmem>>, vector<8x32xf32>
    tpu.vector_store %arg5[%c0_84, %c0_85], %388 {strides = array<i32>} : memref<8x32xf32, #tpu.memory_space<vmem>>, vector<8x32xf32>,
    return
  }
  func.func @transform_0(%arg0: i32) -> (i32, i32, i32) {
    %c0_i32 = arith.constant 0 : i32
    %c0_i32_0 = arith.constant 0 : i32
    %c0_i32_1 = arith.constant 0 : i32
    return %arg0, %c0_i32, %c0_i32_0 : i32, i32, i32
  }
  func.func @transform_1(%arg0: i32) -> (i32, i32, i32) {
    %c0_i32 = arith.constant 0 : i32
    %c0_i32_0 = arith.constant 0 : i32
    %c0_i32_1 = arith.constant 0 : i32
    %c0_i32_2 = arith.constant 0 : i32
    return %c0_i32, %c0_i32_0, %c0_i32_1 : i32, i32, i32
  }
  func.func @transform_2(%arg0: i32) -> (i32, i32, i32) {
    %c0_i32 = arith.constant 0 : i32
    %c0_i32_0 = arith.constant 0 : i32
    %c0_i32_1 = arith.constant 0 : i32
    %c0_i32_2 = arith.constant 0 : i32
    return %c0_i32, %c0_i32_0, %c0_i32_1 : i32, i32, i32
  }
  func.func @transform_3(%arg0: i32) -> (i32, i32, i32) {
    %c0_i32 = arith.constant 0 : i32
    %c0_i32_0 = arith.constant 0 : i32
    %c0_i32_1 = arith.constant 0 : i32
    %c0_i32_2 = arith.constant 0 : i32
    return %c0_i32, %c0_i32_0, %c0_i32_1 : i32, i32, i32
  }
  func.func @transform_4(%arg0: i32) -> (i32, i32) {
    %c0_i32 = arith.constant 0 : i32
    %c0_i32_0 = arith.constant 0 : i32
    return %arg0, %c0_i32 : i32, i32
  }
}

</mosaic_0001>

<llo_original>
// kernel: tpu_custom_call.1
$region0: #{tpu_custom_call.1}
  #allocation0 [shape = 'u32[]', space=smem, size = 0x4, offset = 0x4, fixed_abs, tag = 'smem constant byte address 0x4 - core index']
  #allocation1 [shape = 'u32[144,128]{1,0:T(1,128)}', space=vmem, size = 0x12000, scoped, tag = 'internal scratch']
  %s0 = inlined_call_operand.vmem [shape: f32[2,64,32], index: 0, kind: input, shape index: {}]
  %s1 = inlined_call_operand.vmem [shape: f32[2,32,128], index: 1, kind: input, shape index: {}]
  %s2 = inlined_call_operand.vmem [shape: f32[2,32,128], index: 2, kind: input, shape index: {}]
  %s3 = inlined_call_operand.vmem [shape: f32[2,1,128], index: 3, kind: input, shape index: {}]
  %s4 = inlined_call_operand.hbm [shape: f32[16,32], index: 4, kind: output, shape index: {}]
  %s5 = sld [smem:[#allocation0]]
  $region49: #{tpu_custom_call.1} parent=0
    _
  %s7 = ssub.s32 1, %s5
  %s8 = scalar_select 0, %s7, %s5
  $region1: #{tpu_custom_call.1} parent=0
    #allocation2 [shape = 'u8[8192]{0}', space=vmem, size = 0x2000, scoped, tag = 'output window, operand 0']
    #allocation3 [shape = 's32[2]{0}', space=sflag, size = 0x8, scoped, tag = 'scoped memory for tpu_custom_call.1']
    %9 = vsyncpa [#allocation3], 0
    %s10 = scalar_lea.sflag [#allocation3], 1
    %11 = vsyncpa %s10, 0
    loop: start=0, step=1, limit=4
    $region2: #{tpu_custom_call.1} parent=1 // loop_pre_header
      _
    $region3: #{tpu_custom_call.1} parent=1 // loop_header
      %s13 = sphi 0, %s17
      %p14 = scmp.ge.s32.totalorder %s13, 4
      %s23 = sphi 0, %s25
      %s26 = sphi 0, %s23
      %s27 = sphi 0, %s26
      %s43 = sphi 0, %s27
      %s47 = sphi 0, %s47
      %s49 = sphi 0, %s47
      %s50 = sphi 0, %s49
      %s64 = sphi 0, %s50
      %s68 = sphi 0, %s68
      %s70 = sphi 0, %s68
      %s71 = sphi 0, %s70
      %s85 = sphi 0, %s71
      %s89 = sphi 0, %s89
      %s91 = sphi 0, %s89
      %s92 = sphi 0, %s91
      %s106 = sphi 0, %s92
      %s112 = sphi 0, %s114
      %s115 = sphi 0, %s112
      %s116 = sphi 0, %s115
      %s132 = sphi 0, %s116
    $region4: #{tpu_custom_call.1} parent=1 // loop_header_branch
      %16 = sbr.rel (%p14) target = $region8
    $region5: #{tpu_custom_call.1} parent=1 // loop_body
      %s18 = ssub.s32 %s13, 1
      %s19 = ssub.s32 %s13, 2
      %s20 = sadd.s32 %s13, 1
      %s21 = ssub.s32 %s13, %s20
      %p22 = scmp.eq.s32.totalorder %s21, 0
      %s24 = sadd.s32 %s23, 1
      %s25 = scalar_select %p22, %s23, %s24
      %p28 = pneg %p22
      %p29 = scmp.eq.s32.totalorder %s13, 1
      %p30 = por %p28, %p29
      %p31 = scmp.ne.s32.totalorder %s23, %s26
      %p32 = scmp.eq.s32.totalorder %s13, 0
      %p33 = por %p31, %p32
      %p34 = scmp.ne.s32.totalorder %s23, %s26
      %p35 = scmp.eq.s32.totalorder %s18, 1
      %p36 = por %p34, %p35
      %p37 = scmp.ne.s32.totalorder %s26, %s27
      %p38 = scmp.eq.s32.totalorder %s18, 0
      %p39 = por %p37, %p38
      %p40 = scmp.ne.s32.totalorder %s26, %s27
      %p41 = scmp.eq.s32.totalorder %s19, 1
      %p42 = por %p40, %p41
      %p44 = scmp.ne.s32.totalorder %s27, %s43
      %p45 = scmp.eq.s32.totalorder %s19, 0
      %p46 = por %p44, %p45
      %s48 = sadd.s32 %s47, 1
      %p51 = scmp.eq.s32.totalorder %s13, 1
      %p52 = scmp.ne.s32.totalorder %s47, %s49
      %p53 = scmp.eq.s32.totalorder %s13, 0
      %p54 = por %p52, %p53
      %p55 = scmp.ne.s32.totalorder %s47, %s49
      %p56 = scmp.eq.s32.totalorder %s18, 1
      %p57 = por %p55, %p56
      %p58 = scmp.ne.s32.totalorder %s49, %s50
      %p59 = scmp.eq.s32.totalorder %s18, 0
      %p60 = por %p58, %p59
      %p61 = scmp.ne.s32.totalorder %s49, %s50
      %p62 = scmp.eq.s32.totalorder %s19, 1
      %p63 = por %p61, %p62
      %p65 = scmp.ne.s32.totalorder %s50, %s64
      %p66 = scmp.eq.s32.totalorder %s19, 0
      %p67 = por %p65, %p66
      %s69 = sadd.s32 %s68, 1
      %p72 = scmp.eq.s32.totalorder %s13, 1
      %p73 = scmp.ne.s32.totalorder %s68, %s70
      %p74 = scmp.eq.s32.totalorder %s13, 0
      %p75 = por %p73, %p74
      %p76 = scmp.ne.s32.totalorder %s68, %s70
      %p77 = scmp.eq.s32.totalorder %s18, 1
      %p78 = por %p76, %p77
      %p79 = scmp.ne.s32.totalorder %s70, %s71
      %p80 = scmp.eq.s32.totalorder %s18, 0
      %p81 = por %p79, %p80
      %p82 = scmp.ne.s32.totalorder %s70, %s71
      %p83 = scmp.eq.s32.totalorder %s19, 1
      %p84 = por %p82, %p83
      %p86 = scmp.ne.s32.totalorder %s71, %s85
      %p87 = scmp.eq.s32.totalorder %s19, 0
      %p88 = por %p86, %p87
      %s90 = sadd.s32 %s89, 1
      %p93 = scmp.eq.s32.totalorder %s13, 1
      %p94 = scmp.ne.s32.totalorder %s89, %s91
      %p95 = scmp.eq.s32.totalorder %s13, 0
      %p96 = por %p94, %p95
      %p97 = scmp.ne.s32.totalorder %s89, %s91
      %p98 = scmp.eq.s32.totalorder %s18, 1
      %p99 = por %p97, %p98
      %p100 = scmp.ne.s32.totalorder %s91, %s92
      %p101 = scmp.eq.s32.totalorder %s18, 0
      %p102 = por %p100, %p101
      %p103 = scmp.ne.s32.totalorder %s91, %s92
      %p104 = scmp.eq.s32.totalorder %s19, 1
      %p105 = por %p103, %p104
      %p107 = scmp.ne.s32.totalorder %s92, %s106
      %p108 = scmp.eq.s32.totalorder %s19, 0
      %p109 = por %p107, %p108
      %s110 = ssub.s32 %s13, %s20
      %p111 = scmp.eq.s32.totalorder %s110, 0
      %s113 = sadd.s32 %s112, 1
      %s114 = scalar_select %p111, %s112, %s113
      %p117 = pneg %p111
      %p118 = scmp.eq.s32.totalorder %s13, 1
      %p119 = por %p117, %p118
      %p120 = scmp.ne.s32.totalorder %s112, %s115
      %p121 = scmp.eq.s32.totalorder %s13, 0
      %p122 = por %p120, %p121
      %p123 = scmp.ne.s32.totalorder %s112, %s115
      %p124 = scmp.eq.s32.totalorder %s18, 1
      %p125 = por %p123, %p124
      %p126 = scmp.ne.s32.totalorder %s115, %s116
      %p127 = scmp.eq.s32.totalorder %s18, 0
      %p128 = por %p126, %p127
      %p129 = scmp.ne.s32.totalorder %s115, %s116
      %p130 = scmp.eq.s32.totalorder %s19, 1
      %p131 = por %p129, %p130
      %p133 = scmp.ne.s32.totalorder %s116, %s132
      %p134 = scmp.eq.s32.totalorder %s19, 0
      %p135 = por %p133, %p134
      %p136 = scmp.le.s32.totalorder 1, %s13
      %p137 = scmp.lt.s32.totalorder %s13, 3
      %p138 = pnand %p136, %p137
      %p139 = pneg %p138
      // Predicated region
      $region9: #{tpu_custom_call.1} parent=5 // pred_check
        _
      $region10: #{tpu_custom_call.1} parent=5 // pred_check_branch
        %141 = sbr.rel (%p138) target = $region12
      $region11: #{tpu_custom_call.1} parent=5 // pred_region
        %s142 = ssub.s32 %s13, 1
        // Predicated region
        $region13: #{tpu_custom_call.1} parent=11 // pred_check
          %p143 = pneg %p60
        $region14: #{tpu_custom_call.1} parent=11 // pred_check_branch
          %145 = sbr.rel (%p143) target = $region16
        $region15: #{tpu_custom_call.1} parent=11 // pred_region
          _
        $region16: #{tpu_custom_call.1} parent=11 // pred_fallthru
          _
        // Predicated region
        $region17: #{tpu_custom_call.1} parent=11 // pred_check
          %p146 = pneg %p81
        $region18: #{tpu_custom_call.1} parent=11 // pred_check_branch
          %148 = sbr.rel (%p146) target = $region20
        $region19: #{tpu_custom_call.1} parent=11 // pred_region
          _
        $region20: #{tpu_custom_call.1} parent=11 // pred_fallthru
          _
        // Predicated region
        $region21: #{tpu_custom_call.1} parent=11 // pred_check
          %p149 = pneg %p102
        $region22: #{tpu_custom_call.1} parent=11 // pred_check_branch
          %151 = sbr.rel (%p149) target = $region24
        $region23: #{tpu_custom_call.1} parent=11 // pred_region
          _
        $region24: #{tpu_custom_call.1} parent=11 // pred_fallthru
          _
      $region12: #{tpu_custom_call.1} parent=5 // pred_fallthru
        _
      %p152 = scmp.lt.s32.totalorder %s13, 2
      // Predicated region
      $region25: #{tpu_custom_call.1} parent=5 // pred_check
        %p153 = pneg %p152
      $region26: #{tpu_custom_call.1} parent=5 // pred_check_branch
        %155 = sbr.rel (%p153) target = $region28
      $region27: #{tpu_custom_call.1} parent=5 // pred_region
        // Predicated region
        $region29: #{tpu_custom_call.1} parent=27 // pred_check
          %p156 = pneg %p33
        $region30: #{tpu_custom_call.1} parent=27 // pred_check_branch
          %158 = sbr.rel (%p156) target = $region32
        $region31: #{tpu_custom_call.1} parent=27 // pred_region
          %p159 = scmp.lt.s32.totalorder %s13, 1
          %s160 = scalar_select %p159, %s13, 1
          %s161 = smul.addr %s160, 8
          %s162 = smul.addr %s161, 8
          %s163 = scalar_lea.vmem %s0, %s162
        $region32: #{tpu_custom_call.1} parent=27 // pred_fallthru
          _
      $region28: #{tpu_custom_call.1} parent=5 // pred_fallthru
        _
      %p164 = scmp.le.s32.totalorder 1, %s13
      %p165 = scmp.lt.s32.totalorder %s13, 3
      %p166 = pnand %p164, %p165
      %p167 = pneg %p166
      // Predicated region
      $region33: #{tpu_custom_call.1} parent=5 // pred_check
        _
      $region34: #{tpu_custom_call.1} parent=5 // pred_check_branch
        %169 = sbr.rel (%p166) target = $region36
      $region35: #{tpu_custom_call.1} parent=5 // pred_region
        %s170 = ssub.s32 %s13, 1
        %p171 = scmp.lt.s32.totalorder %s18, 1
        %s172 = scalar_select %p171, %s18, 1
        %s173 = smul.addr %s172, 8
        %s174 = smul.addr %s173, 8
        %s175 = scalar_lea.vmem %s0, %s174
        %p176 = pneg %p39
        %p177 = pneg %p36
        %p178 = pneg %p60
        %p179 = pneg %p57
        %p180 = pneg %p81
        %p181 = pneg %p78
        %p182 = pneg %p102
        %p183 = pneg %p99
        %p184 = pneg %p128
        %p185 = pneg %p125
        %s186 = sand.u32 %s115, 1
        %s187 = scalar_lea.sflag [#allocation3], %s186
        %s188 = sand.u32 %s115, 1
        %s189 = smul.addr %s188, 8
        %s190 = scalar_lea.vmem [#allocation2], %s189
        %p191 = scmp.lt.s32.totalorder %s18, 1
        %s192 = scalar_select %p191, %s18, 1
        %s193 = smul.addr %s192, 8
        %s194 = smul.addr %s193, 8
        %s195 = scalar_lea.vmem %s0, %s194
        %v197 = vlaneseq
        %v198 = vand.u32 %v197, 127
        %vm199 = vcmp.ge.s32.totalorder %v198, 64
        %vm200 = vcmp.lt.s32.totalorder %v198, 96
        %vm201 = vmand %vm199, %vm200
        %v202 = vld [vmem:[%s195] sm:$0xff]
        %v203 = vld [vmem:[%s195 + $0x8] sm:$0xff]
        %v204 = vld [vmem:[%s195 + $0x10] sm:$0xff]
        %v205 = vld [vmem:[%s195 + $0x18] sm:$0xff]
        %v206 = vld [vmem:[%s195 + $0x20] sm:$0xff]
        %v207 = vld [vmem:[%s195 + $0x28] sm:$0xff]
        %v208 = vld [vmem:[%s195 + $0x30] sm:$0xff]
        %v209 = vld [vmem:[%s195 + $0x38] sm:$0xff]
        %v210 = vpack.c.bf16 %v203, %v202
        %v211 = vpack.c.bf16 %v205, %v204
        %v212 = vpack.c.bf16 %v207, %v206
        %v213 = vpack.c.bf16 %v209, %v208
        %v214 = vld [vmem:[%s1] sm:$0xff]
        %v215 = vld [vmem:[%s1 + $0x8] sm:$0xff]
        %v216 = vld [vmem:[%s1 + $0x10] sm:$0xff]
        %v217 = vld [vmem:[%s1 + $0x18] sm:$0xff]
        %v218 = vpack.c.bf16 %v215, %v214
        %v219 = vpack.c.bf16 %v217, %v216
        %v220 = vld [vmem:[%s3] sm:$0x1]
        %v222 = vlaneseq
        %v223 = vshrl.u32 %v222, 7
        %v224 = vsub.s32 0, %v223
        %v225 = vrot.slane %v220, %v224
        %vm227 = vcmask 261120
        %v229 = vsel %vm227, %v210, 0
        %v232 = vsel %vm227, %v211, 0
        %v235 = vsel %vm227, %v212, 0
        %v238 = vsel %vm227, %v213, 0
        %240 = vmatprep.subr.bf16.mxu0 0
        %241 = vmatpush1.bf16.msra.mxu0 %v218
        %242 = vmatprep.subr.bf16.mxu0 0
        %243 = vmatpush1.bf16.msra.mxu0 %v219
        %244 = vmatprep.subr.bf16.mxu0 0
        %245 = vmatpush1.bf16.msra.mxu0 0
        %246 = vmatprep.subr.bf16.mxu0 0
        %247 = vmatpush1.bf16.msra.mxu0 0
        %248 = vmatprep.subr.bf16.mxu0 0
        %249 = vmatpush1.bf16.msra.mxu0 0
        %250 = vmatprep.subr.bf16.mxu0 0
        %251 = vmatpush1.bf16.msra.mxu0 0
        %252 = vmatprep.subr.bf16.mxu0 0
        %253 = vmatpush1.bf16.msra.mxu0 0
        %254 = vmatprep.subr.bf16.mxu0 0
        %255 = vmatpush1.bf16.msra.mxu0 0
        %256 = vmatprep.subr.bf16.mxu0 0
        %257 = vmatpush1.bf16.msra.mxu0 0
        %258 = vmatprep.subr.bf16.mxu0 0
        %259 = vmatpush1.bf16.msra.mxu0 0
        %260 = vmatprep.subr.bf16.mxu0 0
        %261 = vmatpush1.bf16.msra.mxu0 0
        %262 = vmatprep.subr.bf16.mxu0 0
        %263 = vmatpush1.bf16.msra.mxu0 0
        %264 = vmatprep.subr.bf16.mxu0 0
        %265 = vmatpush1.bf16.msra.mxu0 0
        %266 = vmatprep.subr.bf16.mxu0 0
        %267 = vmatpush1.bf16.msra.mxu0 0
        %268 = vmatprep.subr.bf16.mxu0 0
        %269 = vmatpush1.bf16.msra.mxu0 0
        %270 = vmatprep.subr.bf16.mxu0 0
        %271 = vmatpush1.bf16.msra.mxu0 0
        %272 = vmatprep.mubr.bf16.mxu0 0
        %273 = vmatmul.mubr.bf16.gmra.mrb[0].mxu0 %v229
        %v274 = vpop.f32.mrb[0].mxu0
        %v275 = vadd.f32 %v225, %v274
        %v276 = vpop.f32.mrb[0].mxu0
        %v277 = vpop.f32.mrb[0].mxu0
        %v278 = vadd.f32 %v225, %v277
        %v279 = vpop.f32.mrb[0].mxu0
        %280 = vmatprep.mubr.bf16.mxu0 0
        %281 = vmatmul.mubr.bf16.gmra.mrb[0].mxu0 %v232
        %v282 = vpop.f32.mrb[0].mxu0
        %v283 = vadd.f32 %v225, %v282
        %v284 = vpop.f32.mrb[0].mxu0
        %v285 = vpop.f32.mrb[0].mxu0
        %v286 = vadd.f32 %v225, %v285
        %v287 = vpop.f32.mrb[0].mxu0
        %288 = vmatprep.mubr.bf16.mxu0 0
        %289 = vmatmul.mubr.bf16.gmra.mrb[0].mxu0 %v235
        %v290 = vpop.f32.mrb[0].mxu0
        %v291 = vadd.f32 %v225, %v290
        %v292 = vpop.f32.mrb[0].mxu0
        %v293 = vpop.f32.mrb[0].mxu0
        %v294 = vadd.f32 %v225, %v293
        %v295 = vpop.f32.mrb[0].mxu0
        %296 = vmatprep.mubr.bf16.mxu0 0
        %297 = vmatmul.mubr.bf16.gmra.mrb[0].mxu0 %v238
        %v298 = vpop.f32.mrb[0].mxu0
        %v299 = vadd.f32 %v225, %v298
        %v300 = vpop.f32.mrb[0].mxu0
        %v301 = vpop.f32.mrb[0].mxu0
        %v302 = vadd.f32 %v225, %v301
        %v303 = vpop.f32.mrb[0].mxu0
        %304 = vdwg.mxu0
        %v305 = vld [vmem:[%s2] sm:$0xff]
        %v306 = vld [vmem:[%s2 + $0x8] sm:$0xff]
        %v307 = vld [vmem:[%s2 + $0x10] sm:$0xff]
        %v308 = vld [vmem:[%s2 + $0x18] sm:$0xff]
        %v309 = vpack.c.bf16 %v306, %v305
        %v310 = vpack.c.bf16 %v308, %v307
        %s311 = scalar_lea.vmem %s1, 32
        %v312 = vld [vmem:[%s311] sm:$0xff]
        %v313 = vld [vmem:[%s311 + $0x8] sm:$0xff]
        %v314 = vld [vmem:[%s311 + $0x10] sm:$0xff]
        %v315 = vld [vmem:[%s311 + $0x18] sm:$0xff]
        %s316 = scalar_lea.vmem %s2, 32
        %v317 = vld [vmem:[%s316] sm:$0xff]
        %v318 = vld [vmem:[%s316 + $0x8] sm:$0xff]
        %v319 = vld [vmem:[%s316 + $0x10] sm:$0xff]
        %v320 = vld [vmem:[%s316 + $0x18] sm:$0xff]
        %v321 = vpack.c.bf16 %v313, %v312
        %v322 = vpack.c.bf16 %v315, %v314
        %v323 = vpack.c.bf16 %v318, %v317
        %v324 = vpack.c.bf16 %v320, %v319
        %s325 = scalar_lea.vmem %s3, 1
        %v326 = vld [vmem:[%s325] sm:$0x1]
        %v328 = vsel %vm227, 0, 0
        %330 = vmatprep.subr.bf16.mxu0 0
        %331 = vmatpush1.bf16.msra.mxu0 %v309
        %332 = vmatprep.subr.bf16.mxu0 0
        %333 = vmatpush1.bf16.msra.mxu0 %v310
        %334 = vmatprep.subr.bf16.mxu0 0
        %335 = vmatpush1.bf16.msra.mxu0 0
        %336 = vmatprep.subr.bf16.mxu0 0
        %337 = vmatpush1.bf16.msra.mxu0 0
        %338 = vmatprep.subr.bf16.mxu0 0
        %339 = vmatpush1.bf16.msra.mxu0 0
        %340 = vmatprep.subr.bf16.mxu0 0
        %341 = vmatpush1.bf16.msra.mxu0 0
        %342 = vmatprep.subr.bf16.mxu0 0
        %343 = vmatpush1.bf16.msra.mxu0 0
        %344 = vmatprep.subr.bf16.mxu0 0
        %345 = vmatpush1.bf16.msra.mxu0 0
        %346 = vmatprep.subr.bf16.mxu0 0
        %347 = vmatpush1.bf16.msra.mxu0 0
        %348 = vmatprep.subr.bf16.mxu0 0
        %349 = vmatpush1.bf16.msra.mxu0 0
        %350 = vmatprep.subr.bf16.mxu0 0
        %351 = vmatpush1.bf16.msra.mxu0 0
        %352 = vmatprep.subr.bf16.mxu0 0
        %353 = vmatpush1.bf16.msra.mxu0 0
        %354 = vmatprep.subr.bf16.mxu0 0
        %355 = vmatpush1.bf16.msra.mxu0 0
        %356 = vmatprep.subr.bf16.mxu0 0
        %357 = vmatpush1.bf16.msra.mxu0 0
        %358 = vmatprep.subr.bf16.mxu0 0
        %359 = vmatpush1.bf16.msra.mxu0 0
        %360 = vmatprep.subr.bf16.mxu0 0
        %361 = vmatpush1.bf16.msra.mxu0 0
        %362 = vmatprep.mubr.bf16.mxu0 0
        %363 = vmatmul.mubr.bf16.gmra.mrb[0].mxu0 %v328
        %v364 = vpop.f32.mrb[0].mxu0
        %v365 = vadd.f32 0.0, %v364
        %v366 = vpop.f32.mrb[0].mxu0
        %v367 = vpop.f32.mrb[0].mxu0
        %v368 = vpop.f32.mrb[0].mxu0
        %369 = vdwg.mxu0
        %v370 = vadd.f32 %v275, %v365
        %v371 = vmul.f32 %v370, 0.5
        %v372 = vsel %vm201, %v370, %v371
        %v373 = vtanh.pop %v372
        %v374 = vmul.f32 %v373, 0.5
        %v375 = vadd.f32 %v374, 0.5
        %v376 = vsel %vm201, %v373, %v375
        %v377 = vmul.f32 %v376, 0.0
        %379 = vrot.lane.b32.xlu0 %v376, 64
        %v380 = vpop.permute.xlu0 %379
        %v382 = vmul.f32 %v376, %v380
        %384 = vrot.lane.b32.xlu0 %v382, 32
        %v385 = vpop.permute.xlu0 %384
        %v387 = vadd.f32 %v377, %v385
        %v388 = vtanh.pop %v387
        %390 = vrot.lane.b32.xlu0 %v388, 64
        %v391 = vpop.permute.xlu0 %390
        %v393 = vmul.f32 %v376, %v391
        %v394 = vpack.c.bf16 %v393, %v393
        %396 = vrot.lane.b32.xlu0 %v394, 32
        %v397 = vpop.permute.xlu0 %396
        %v399 = vsel %vm227, %v397, 0
        %401 = vmatprep.subr.bf16.mxu0 0
        %402 = vmatpush1.bf16.msra.mxu0 %v309
        %403 = vmatprep.subr.bf16.mxu0 0
        %404 = vmatpush1.bf16.msra.mxu0 %v310
        %405 = vmatprep.subr.bf16.mxu0 0
        %406 = vmatpush1.bf16.msra.mxu0 0
        %407 = vmatprep.subr.bf16.mxu0 0
        %408 = vmatpush1.bf16.msra.mxu0 0
        %409 = vmatprep.subr.bf16.mxu0 0
        %410 = vmatpush1.bf16.msra.mxu0 0
        %411 = vmatprep.subr.bf16.mxu0 0
        %412 = vmatpush1.bf16.msra.mxu0 0
        %413 = vmatprep.subr.bf16.mxu0 0
        %414 = vmatpush1.bf16.msra.mxu0 0
        %415 = vmatprep.subr.bf16.mxu0 0
        %416 = vmatpush1.bf16.msra.mxu0 0
        %417 = vmatprep.subr.bf16.mxu0 0
        %418 = vmatpush1.bf16.msra.mxu0 0
        %419 = vmatprep.subr.bf16.mxu0 0
        %420 = vmatpush1.bf16.msra.mxu0 0
        %421 = vmatprep.subr.bf16.mxu0 0
        %422 = vmatpush1.bf16.msra.mxu0 0
        %423 = vmatprep.subr.bf16.mxu0 0
        %424 = vmatpush1.bf16.msra.mxu0 0
        %425 = vmatprep.subr.bf16.mxu0 0
        %426 = vmatpush1.bf16.msra.mxu0 0
        %427 = vmatprep.subr.bf16.mxu0 0
        %428 = vmatpush1.bf16.msra.mxu0 0
        %429 = vmatprep.subr.bf16.mxu0 0
        %430 = vmatpush1.bf16.msra.mxu0 0
        %431 = vmatprep.subr.bf16.mxu0 0
        %432 = vmatpush1.bf16.msra.mxu0 0
        %433 = vmatprep.mubr.bf16.mxu0 0
        %434 = vmatmul.mubr.bf16.gmra.mrb[0].mxu0 %v399
        %v435 = vpop.f32.mrb[0].mxu0
        %v436 = vadd.f32 0.0, %v435
        %v437 = vpop.f32.mrb[0].mxu0
        %v438 = vpop.f32.mrb[0].mxu0
        %v439 = vpop.f32.mrb[0].mxu0
        %440 = vdwg.mxu0
        %v441 = vadd.f32 %v278, %v436
        %v442 = vmul.f32 %v441, 0.5
        %v443 = vsel %vm201, %v441, %v442
        %v444 = vtanh.pop %v443
        %v445 = vmul.f32 %v444, 0.5
        %v446 = vadd.f32 %v445, 0.5
        %v447 = vsel %vm201, %v444, %v446
        %v448 = vmul.f32 %v447, %v387
        %450 = vrot.lane.b32.xlu0 %v447, 64
        %v451 = vpop.permute.xlu0 %450
        %v453 = vmul.f32 %v447, %v451
        %455 = vrot.lane.b32.xlu0 %v453, 32
        %v456 = vpop.permute.xlu0 %455
        %v458 = vadd.f32 %v448, %v456
        %v459 = vtanh.pop %v458
        %461 = vrot.lane.b32.xlu0 %v459, 64
        %v462 = vpop.permute.xlu0 %461
        %v464 = vmul.f32 %v447, %v462
        %466 = vrot.lane.b32.xlu0 %v393, 32
        %v467 = vpop.permute.xlu0 %466
        %v469 = vsel %vm227, %v467, 0.0
        %v470 = vpack.c.bf16 %v469, %v469
        %v472 = vlaneseq
        %v473 = vshrl.u32 %v472, 7
        %v474 = vsub.s32 0, %v473
        %v475 = vrot.slane %v326, %v474
        %vm477 = vcmask 523264
        %v479 = vsel %vm477, %v470, 0
        %481 = vmatprep.subr.bf16.mxu0 0
        %482 = vmatpush1.bf16.msra.mxu0 %v321
        %483 = vmatprep.subr.bf16.mxu0 0
        %484 = vmatpush1.bf16.msra.mxu0 %v322
        %485 = vmatprep.subr.bf16.mxu0 0
        %486 = vmatpush1.bf16.msra.mxu0 %v323
        %487 = vmatprep.subr.bf16.mxu0 0
        %488 = vmatpush1.bf16.msra.mxu0 %v324
        %489 = vmatprep.subr.bf16.mxu0 0
        %490 = vmatpush1.bf16.msra.mxu0 0
        %491 = vmatprep.subr.bf16.mxu0 0
        %492 = vmatpush1.bf16.msra.mxu0 0
        %493 = vmatprep.subr.bf16.mxu0 0
        %494 = vmatpush1.bf16.msra.mxu0 0
        %495 = vmatprep.subr.bf16.mxu0 0
        %496 = vmatpush1.bf16.msra.mxu0 0
        %497 = vmatprep.subr.bf16.mxu0 0
        %498 = vmatpush1.bf16.msra.mxu0 0
        %499 = vmatprep.subr.bf16.mxu0 0
        %500 = vmatpush1.bf16.msra.mxu0 0
        %501 = vmatprep.subr.bf16.mxu0 0
        %502 = vmatpush1.bf16.msra.mxu0 0
        %503 = vmatprep.subr.bf16.mxu0 0
        %504 = vmatpush1.bf16.msra.mxu0 0
        %505 = vmatprep.subr.bf16.mxu0 0
        %506 = vmatpush1.bf16.msra.mxu0 0
        %507 = vmatprep.subr.bf16.mxu0 0
        %508 = vmatpush1.bf16.msra.mxu0 0
        %509 = vmatprep.subr.bf16.mxu0 0
        %510 = vmatpush1.bf16.msra.mxu0 0
        %511 = vmatprep.subr.bf16.mxu0 0
        %512 = vmatpush1.bf16.msra.mxu0 0
        %513 = vmatprep.mubr.bf16.mxu0 0
        %514 = vmatmul.mubr.bf16.gmra.mrb[0].mxu0 %v479
        %v515 = vpop.f32.mrb[0].mxu0
        %v516 = vadd.f32 %v475, %v515
        %v517 = vpop.f32.mrb[0].mxu0
        %v518 = vpop.f32.mrb[0].mxu0
        %v519 = vpop.f32.mrb[0].mxu0
        %520 = vdwg.mxu0
        %v521 = vmul.f32 %v516, 0.5
        %v522 = vsel %vm201, %v516, %v521
        %v523 = vtanh.pop %v522
        %v524 = vmul.f32 %v523, 0.5
        %v525 = vadd.f32 %v524, 0.5
        %v526 = vsel %vm201, %v523, %v525
        %v527 = vmul.f32 %v526, 0.0
        %529 = vrot.lane.b32.xlu0 %v526, 64
        %v530 = vpop.permute.xlu0 %529
        %v532 = vmul.f32 %v526, %v530
        %534 = vrot.lane.b32.xlu0 %v532, 32
        %v535 = vpop.permute.xlu0 %534
        %v537 = vadd.f32 %v527, %v535
        %v538 = vtanh.pop %v537
        %540 = vrot.lane.b32.xlu0 %v538, 64
        %v541 = vpop.permute.xlu0 %540
        %v543 = vmul.f32 %v526, %v541
        %v544 = vpack.c.bf16 %v464, %v464
        %546 = vrot.lane.b32.xlu0 %v544, 32
        %v547 = vpop.permute.xlu0 %546
        %v549 = vsel %vm227, %v547, 0
        %551 = vmatprep.subr.bf16.mxu0 0
        %552 = vmatpush1.bf16.msra.mxu0 %v309
        %553 = vmatprep.subr.bf16.mxu0 0
        %554 = vmatpush1.bf16.msra.mxu0 %v310
        %555 = vmatprep.subr.bf16.mxu0 0
        %556 = vmatpush1.bf16.msra.mxu0 0
        %557 = vmatprep.subr.bf16.mxu0 0
        %558 = vmatpush1.bf16.msra.mxu0 0
        %559 = vmatprep.subr.bf16.mxu0 0
        %560 = vmatpush1.bf16.msra.mxu0 0
        %561 = vmatprep.subr.bf16.mxu0 0
        %562 = vmatpush1.bf16.msra.mxu0 0
        %563 = vmatprep.subr.bf16.mxu0 0
        %564 = vmatpush1.bf16.msra.mxu0 0
        %565 = vmatprep.subr.bf16.mxu0 0
        %566 = vmatpush1.bf16.msra.mxu0 0
        %567 = vmatprep.subr.bf16.mxu0 0
        %568 = vmatpush1.bf16.msra.mxu0 0
        %569 = vmatprep.subr.bf16.mxu0 0
        %570 = vmatpush1.bf16.msra.mxu0 0
        %571 = vmatprep.subr.bf16.mxu0 0
        %572 = vmatpush1.bf16.msra.mxu0 0
        %573 = vmatprep.subr.bf16.mxu0 0
        %574 = vmatpush1.bf16.msra.mxu0 0
        %575 = vmatprep.subr.bf16.mxu0 0
        %576 = vmatpush1.bf16.msra.mxu0 0
        %577 = vmatprep.subr.bf16.mxu0 0
        %578 = vmatpush1.bf16.msra.mxu0 0
        %579 = vmatprep.subr.bf16.mxu0 0
        %580 = vmatpush1.bf16.msra.mxu0 0
        %581 = vmatprep.subr.bf16.mxu0 0
        %582 = vmatpush1.bf16.msra.mxu0 0
        %583 = vmatprep.mubr.bf16.mxu0 0
        %584 = vmatmul.mubr.bf16.gmra.mrb[0].mxu0 %v549
        %v585 = vpop.f32.mrb[0].mxu0
        %v586 = vadd.f32 0.0, %v585
        %v587 = vpop.f32.mrb[0].mxu0
        %v588 = vpop.f32.mrb[0].mxu0
        %v589 = vpop.f32.mrb[0].mxu0
        %590 = vdwg.mxu0
        %v591 = vadd.f32 %v283, %v586
        %v592 = vmul.f32 %v591, 0.5
        %v593 = vsel %vm201, %v591, %v592
        %v594 = vtanh.pop %v593
        %v595 = vmul.f32 %v594, 0.5
        %v596 = vadd.f32 %v595, 0.5
        %v597 = vsel %vm201, %v594, %v596
        %v598 = vmul.f32 %v597, %v458
        %600 = vrot.lane.b32.xlu0 %v597, 64
        %v601 = vpop.permute.xlu0 %600
        %v603 = vmul.f32 %v597, %v601
        %605 = vrot.lane.b32.xlu0 %v603, 32
        %v606 = vpop.permute.xlu0 %605
        %v608 = vadd.f32 %v598, %v606
        %v609 = vtanh.pop %v608
        %611 = vrot.lane.b32.xlu0 %v609, 64
        %v612 = vpop.permute.xlu0 %611
        %v614 = vmul.f32 %v597, %v612
        %616 = vrot.lane.b32.xlu0 %v464, 32
        %v617 = vpop.permute.xlu0 %616
        %620 = vrot.lane.b32.xlu0 %v543, 64
        %v621 = vpop.permute.xlu0 %620
        %v623 = vsel %vm227, %v617, %v621
        %v624 = vpack.c.bf16 %v623, %v623
        %v626 = vsel %vm477, %v624, 0
        %628 = vmatprep.subr.bf16.mxu0 0
        %629 = vmatpush1.bf16.msra.mxu0 %v321
        %630 = vmatprep.subr.bf16.mxu0 0
        %631 = vmatpush1.bf16.msra.mxu0 %v322
        %632 = vmatprep.subr.bf16.mxu0 0
        %633 = vmatpush1.bf16.msra.mxu0 %v323
        %634 = vmatprep.subr.bf16.mxu0 0
        %635 = vmatpush1.bf16.msra.mxu0 %v324
        %636 = vmatprep.subr.bf16.mxu0 0
        %637 = vmatpush1.bf16.msra.mxu0 0
        %638 = vmatprep.subr.bf16.mxu0 0
        %639 = vmatpush1.bf16.msra.mxu0 0
        %640 = vmatprep.subr.bf16.mxu0 0
        %641 = vmatpush1.bf16.msra.mxu0 0
        %642 = vmatprep.subr.bf16.mxu0 0
        %643 = vmatpush1.bf16.msra.mxu0 0
        %644 = vmatprep.subr.bf16.mxu0 0
        %645 = vmatpush1.bf16.msra.mxu0 0
        %646 = vmatprep.subr.bf16.mxu0 0
        %647 = vmatpush1.bf16.msra.mxu0 0
        %648 = vmatprep.subr.bf16.mxu0 0
        %649 = vmatpush1.bf16.msra.mxu0 0
        %650 = vmatprep.subr.bf16.mxu0 0
        %651 = vmatpush1.bf16.msra.mxu0 0
        %652 = vmatprep.subr.bf16.mxu0 0
        %653 = vmatpush1.bf16.msra.mxu0 0
        %654 = vmatprep.subr.bf16.mxu0 0
        %655 = vmatpush1.bf16.msra.mxu0 0
        %656 = vmatprep.subr.bf16.mxu0 0
        %657 = vmatpush1.bf16.msra.mxu0 0
        %658 = vmatprep.subr.bf16.mxu0 0
        %659 = vmatpush1.bf16.msra.mxu0 0
        %660 = vmatprep.mubr.bf16.mxu0 0
        %661 = vmatmul.mubr.bf16.gmra.mrb[0].mxu0 %v626
        %v662 = vpop.f32.mrb[0].mxu0
        %v663 = vadd.f32 %v475, %v662
        %v664 = vpop.f32.mrb[0].mxu0
        %v665 = vpop.f32.mrb[0].mxu0
        %v666 = vpop.f32.mrb[0].mxu0
        %667 = vdwg.mxu0
        %v668 = vmul.f32 %v663, 0.5
        %v669 = vsel %vm201, %v663, %v668
        %v670 = vtanh.pop %v669
        %v671 = vmul.f32 %v670, 0.5
        %v672 = vadd.f32 %v671, 0.5
        %v673 = vsel %vm201, %v670, %v672
        %v674 = vmul.f32 %v673, %v537
        %676 = vrot.lane.b32.xlu0 %v673, 64
        %v677 = vpop.permute.xlu0 %676
        %v679 = vmul.f32 %v673, %v677
        %681 = vrot.lane.b32.xlu0 %v679, 32
        %v682 = vpop.permute.xlu0 %681
        %v684 = vadd.f32 %v674, %v682
        %v685 = vtanh.pop %v684
        %687 = vrot.lane.b32.xlu0 %v685, 64
        %v688 = vpop.permute.xlu0 %687
        %v690 = vmul.f32 %v673, %v688
        %v691 = vpack.c.bf16 %v614, %v614
        %693 = vrot.lane.b32.xlu0 %v691, 32
        %v694 = vpop.permute.xlu0 %693
        %v696 = vsel %vm227, %v694, 0
        %698 = vmatprep.subr.bf16.mxu0 0
        %699 = vmatpush1.bf16.msra.mxu0 %v309
        %700 = vmatprep.subr.bf16.mxu0 0
        %701 = vmatpush1.bf16.msra.mxu0 %v310
        %702 = vmatprep.subr.bf16.mxu0 0
        %703 = vmatpush1.bf16.msra.mxu0 0
        %704 = vmatprep.subr.bf16.mxu0 0
        %705 = vmatpush1.bf16.msra.mxu0 0
        %706 = vmatprep.subr.bf16.mxu0 0
        %707 = vmatpush1.bf16.msra.mxu0 0
        %708 = vmatprep.subr.bf16.mxu0 0
        %709 = vmatpush1.bf16.msra.mxu0 0
        %710 = vmatprep.subr.bf16.mxu0 0
        %711 = vmatpush1.bf16.msra.mxu0 0
        %712 = vmatprep.subr.bf16.mxu0 0
        %713 = vmatpush1.bf16.msra.mxu0 0
        %714 = vmatprep.subr.bf16.mxu0 0
        %715 = vmatpush1.bf16.msra.mxu0 0
        %716 = vmatprep.subr.bf16.mxu0 0
        %717 = vmatpush1.bf16.msra.mxu0 0
        %718 = vmatprep.subr.bf16.mxu0 0
        %719 = vmatpush1.bf16.msra.mxu0 0
        %720 = vmatprep.subr.bf16.mxu0 0
        %721 = vmatpush1.bf16.msra.mxu0 0
        %722 = vmatprep.subr.bf16.mxu0 0
        %723 = vmatpush1.bf16.msra.mxu0 0
        %724 = vmatprep.subr.bf16.mxu0 0
        %725 = vmatpush1.bf16.msra.mxu0 0
        %726 = vmatprep.subr.bf16.mxu0 0
        %727 = vmatpush1.bf16.msra.mxu0 0
        %728 = vmatprep.subr.bf16.mxu0 0
        %729 = vmatpush1.bf16.msra.mxu0 0
        %730 = vmatprep.mubr.bf16.mxu0 0
        %731 = vmatmul.mubr.bf16.gmra.mrb[0].mxu0 %v696
        %v732 = vpop.f32.mrb[0].mxu0
        %v733 = vadd.f32 0.0, %v732
        %v734 = vpop.f32.mrb[0].mxu0
        %v735 = vpop.f32.mrb[0].mxu0
        %v736 = vpop.f32.mrb[0].mxu0
        %737 = vdwg.mxu0
        %v738 = vadd.f32 %v286, %v733
        %v739 = vmul.f32 %v738, 0.5
        %v740 = vsel %vm201, %v738, %v739
        %v741 = vtanh.pop %v740
        %v742 = vmul.f32 %v741, 0.5
        %v743 = vadd.f32 %v742, 0.5
        %v744 = vsel %vm201, %v741, %v743
        %v745 = vmul.f32 %v744, %v608
        %747 = vrot.lane.b32.xlu0 %v744, 64
        %v748 = vpop.permute.xlu0 %747
        %v750 = vmul.f32 %v744, %v748
        %752 = vrot.lane.b32.xlu0 %v750, 32
        %v753 = vpop.permute.xlu0 %752
        %v755 = vadd.f32 %v745, %v753
        %v756 = vtanh.pop %v755
        %758 = vrot.lane.b32.xlu0 %v756, 64
        %v759 = vpop.permute.xlu0 %758
        %v761 = vmul.f32 %v744, %v759
        %763 = vrot.lane.b32.xlu0 %v614, 32
        %v764 = vpop.permute.xlu0 %763
        %767 = vrot.lane.b32.xlu0 %v690, 64
        %v768 = vpop.permute.xlu0 %767
        %v770 = vsel %vm227, %v764, %v768
        %v771 = vpack.c.bf16 %v770, %v770
        %v773 = vsel %vm477, %v771, 0
        %775 = vmatprep.subr.bf16.mxu0 0
        %776 = vmatpush1.bf16.msra.mxu0 %v321
        %777 = vmatprep.subr.bf16.mxu0 0
        %778 = vmatpush1.bf16.msra.mxu0 %v322
        %779 = vmatprep.subr.bf16.mxu0 0
        %780 = vmatpush1.bf16.msra.mxu0 %v323
        %781 = vmatprep.subr.bf16.mxu0 0
        %782 = vmatpush1.bf16.msra.mxu0 %v324
        %783 = vmatprep.subr.bf16.mxu0 0
        %784 = vmatpush1.bf16.msra.mxu0 0
        %785 = vmatprep.subr.bf16.mxu0 0
        %786 = vmatpush1.bf16.msra.mxu0 0
        %787 = vmatprep.subr.bf16.mxu0 0
        %788 = vmatpush1.bf16.msra.mxu0 0
        %789 = vmatprep.subr.bf16.mxu0 0
        %790 = vmatpush1.bf16.msra.mxu0 0
        %791 = vmatprep.subr.bf16.mxu0 0
        %792 = vmatpush1.bf16.msra.mxu0 0
        %793 = vmatprep.subr.bf16.mxu0 0
        %794 = vmatpush1.bf16.msra.mxu0 0
        %795 = vmatprep.subr.bf16.mxu0 0
        %796 = vmatpush1.bf16.msra.mxu0 0
        %797 = vmatprep.subr.bf16.mxu0 0
        %798 = vmatpush1.bf16.msra.mxu0 0
        %799 = vmatprep.subr.bf16.mxu0 0
        %800 = vmatpush1.bf16.msra.mxu0 0
        %801 = vmatprep.subr.bf16.mxu0 0
        %802 = vmatpush1.bf16.msra.mxu0 0
        %803 = vmatprep.subr.bf16.mxu0 0
        %804 = vmatpush1.bf16.msra.mxu0 0
        %805 = vmatprep.subr.bf16.mxu0 0
        %806 = vmatpush1.bf16.msra.mxu0 0
        %807 = vmatprep.mubr.bf16.mxu0 0
        %808 = vmatmul.mubr.bf16.gmra.mrb[0].mxu0 %v773
        %v809 = vpop.f32.mrb[0].mxu0
        %v810 = vadd.f32 %v475, %v809
        %v811 = vpop.f32.mrb[0].mxu0
        %v812 = vpop.f32.mrb[0].mxu0
        %v813 = vpop.f32.mrb[0].mxu0
        %814 = vdwg.mxu0
        %v815 = vmul.f32 %v810, 0.5
        %v816 = vsel %vm201, %v810, %v815
        %v817 = vtanh.pop %v816
        %v818 = vmul.f32 %v817, 0.5
        %v819 = vadd.f32 %v818, 0.5
        %v820 = vsel %vm201, %v817, %v819
        %v821 = vmul.f32 %v820, %v684
        %823 = vrot.lane.b32.xlu0 %v820, 64
        %v824 = vpop.permute.xlu0 %823
        %v826 = vmul.f32 %v820, %v824
        %828 = vrot.lane.b32.xlu0 %v826, 32
        %v829 = vpop.permute.xlu0 %828
        %v831 = vadd.f32 %v821, %v829
        %v832 = vtanh.pop %v831
        %834 = vrot.lane.b32.xlu0 %v832, 64
        %v835 = vpop.permute.xlu0 %834
        %v837 = vmul.f32 %v820, %v835
        %v838 = vpack.c.bf16 %v761, %v761
        %840 = vrot.lane.b32.xlu0 %v838, 32
        %v841 = vpop.permute.xlu0 %840
        %v843 = vsel %vm227, %v841, 0
        %845 = vmatprep.subr.bf16.mxu0 0
        %846 = vmatpush1.bf16.msra.mxu0 %v309
        %847 = vmatprep.subr.bf16.mxu0 0
        %848 = vmatpush1.bf16.msra.mxu0 %v310
        %849 = vmatprep.subr.bf16.mxu0 0
        %850 = vmatpush1.bf16.msra.mxu0 0
        %851 = vmatprep.subr.bf16.mxu0 0
        %852 = vmatpush1.bf16.msra.mxu0 0
        %853 = vmatprep.subr.bf16.mxu0 0
        %854 = vmatpush1.bf16.msra.mxu0 0
        %855 = vmatprep.subr.bf16.mxu0 0
        %856 = vmatpush1.bf16.msra.mxu0 0
        %857 = vmatprep.subr.bf16.mxu0 0
        %858 = vmatpush1.bf16.msra.mxu0 0
        %859 = vmatprep.subr.bf16.mxu0 0
        %860 = vmatpush1.bf16.msra.mxu0 0
        %861 = vmatprep.subr.bf16.mxu0 0
        %862 = vmatpush1.bf16.msra.mxu0 0
        %863 = vmatprep.subr.bf16.mxu0 0
        %864 = vmatpush1.bf16.msra.mxu0 0
        %865 = vmatprep.subr.bf16.mxu0 0
        %866 = vmatpush1.bf16.msra.mxu0 0
        %867 = vmatprep.subr.bf16.mxu0 0
        %868 = vmatpush1.bf16.msra.mxu0 0
        %869 = vmatprep.subr.bf16.mxu0 0
        %870 = vmatpush1.bf16.msra.mxu0 0
        %871 = vmatprep.subr.bf16.mxu0 0
        %872 = vmatpush1.bf16.msra.mxu0 0
        %873 = vmatprep.subr.bf16.mxu0 0
        %874 = vmatpush1.bf16.msra.mxu0 0
        %875 = vmatprep.subr.bf16.mxu0 0
        %876 = vmatpush1.bf16.msra.mxu0 0
        %877 = vmatprep.mubr.bf16.mxu0 0
        %878 = vmatmul.mubr.bf16.gmra.mrb[0].mxu0 %v843
        %v879 = vpop.f32.mrb[0].mxu0
        %v880 = vadd.f32 0.0, %v879
        %v881 = vpop.f32.mrb[0].mxu0
        %v882 = vpop.f32.mrb[0].mxu0
        %v883 = vpop.f32.mrb[0].mxu0
        %884 = vdwg.mxu0
        %v885 = vadd.f32 %v291, %v880
        %v886 = vmul.f32 %v885, 0.5
        %v887 = vsel %vm201, %v885, %v886
        %v888 = vtanh.pop %v887
        %v889 = vmul.f32 %v888, 0.5
        %v890 = vadd.f32 %v889, 0.5
        %v891 = vsel %vm201, %v888, %v890
        %v892 = vmul.f32 %v891, %v755
        %894 = vrot.lane.b32.xlu0 %v891, 64
        %v895 = vpop.permute.xlu0 %894
        %v897 = vmul.f32 %v891, %v895
        %899 = vrot.lane.b32.xlu0 %v897, 32
        %v900 = vpop.permute.xlu0 %899
        %v902 = vadd.f32 %v892, %v900
        %v903 = vtanh.pop %v902
        %905 = vrot.lane.b32.xlu0 %v903, 64
        %v906 = vpop.permute.xlu0 %905
        %v908 = vmul.f32 %v891, %v906
        %910 = vrot.lane.b32.xlu0 %v761, 32
        %v911 = vpop.permute.xlu0 %910
        %914 = vrot.lane.b32.xlu0 %v837, 64
        %v915 = vpop.permute.xlu0 %914
        %v917 = vsel %vm227, %v911, %v915
        %v918 = vpack.c.bf16 %v917, %v917
        %v920 = vsel %vm477, %v918, 0
        %922 = vmatprep.subr.bf16.mxu0 0
        %923 = vmatpush1.bf16.msra.mxu0 %v321
        %924 = vmatprep.subr.bf16.mxu0 0
        %925 = vmatpush1.bf16.msra.mxu0 %v322
        %926 = vmatprep.subr.bf16.mxu0 0
        %927 = vmatpush1.bf16.msra.mxu0 %v323
        %928 = vmatprep.subr.bf16.mxu0 0
        %929 = vmatpush1.bf16.msra.mxu0 %v324
        %930 = vmatprep.subr.bf16.mxu0 0
        %931 = vmatpush1.bf16.msra.mxu0 0
        %932 = vmatprep.subr.bf16.mxu0 0
        %933 = vmatpush1.bf16.msra.mxu0 0
        %934 = vmatprep.subr.bf16.mxu0 0
        %935 = vmatpush1.bf16.msra.mxu0 0
        %936 = vmatprep.subr.bf16.mxu0 0
        %937 = vmatpush1.bf16.msra.mxu0 0
        %938 = vmatprep.subr.bf16.mxu0 0
        %939 = vmatpush1.bf16.msra.mxu0 0
        %940 = vmatprep.subr.bf16.mxu0 0
        %941 = vmatpush1.bf16.msra.mxu0 0
        %942 = vmatprep.subr.bf16.mxu0 0
        %943 = vmatpush1.bf16.msra.mxu0 0
        %944 = vmatprep.subr.bf16.mxu0 0
        %945 = vmatpush1.bf16.msra.mxu0 0
        %946 = vmatprep.subr.bf16.mxu0 0
        %947 = vmatpush1.bf16.msra.mxu0 0
        %948 = vmatprep.subr.bf16.mxu0 0
        %949 = vmatpush1.bf16.msra.mxu0 0
        %950 = vmatprep.subr.bf16.mxu0 0
        %951 = vmatpush1.bf16.msra.mxu0 0
        %952 = vmatprep.subr.bf16.mxu0 0
        %953 = vmatpush1.bf16.msra.mxu0 0
        %954 = vmatprep.mubr.bf16.mxu0 0
        %955 = vmatmul.mubr.bf16.gmra.mrb[0].mxu0 %v920
        %v956 = vpop.f32.mrb[0].mxu0
        %v957 = vadd.f32 %v475, %v956
        %v958 = vpop.f32.mrb[0].mxu0
        %v959 = vpop.f32.mrb[0].mxu0
        %v960 = vpop.f32.mrb[0].mxu0
        %961 = vdwg.mxu0
        %v962 = vmul.f32 %v957, 0.5
        %v963 = vsel %vm201, %v957, %v962
        %v964 = vtanh.pop %v963
        %v965 = vmul.f32 %v964, 0.5
        %v966 = vadd.f32 %v965, 0.5
        %v967 = vsel %vm201, %v964, %v966
        %v968 = vmul.f32 %v967, %v831
        %970 = vrot.lane.b32.xlu0 %v967, 64
        %v971 = vpop.permute.xlu0 %970
        %v973 = vmul.f32 %v967, %v971
        %975 = vrot.lane.b32.xlu0 %v973, 32
        %v976 = vpop.permute.xlu0 %975
        %v978 = vadd.f32 %v968, %v976
        %v979 = vtanh.pop %v978
        %981 = vrot.lane.b32.xlu0 %v979, 64
        %v982 = vpop.permute.xlu0 %981
        %v984 = vmul.f32 %v967, %v982
        %v985 = vpack.c.bf16 %v908, %v908
        %987 = vrot.lane.b32.xlu0 %v985, 32
        %v988 = vpop.permute.xlu0 %987
        %v990 = vsel %vm227, %v988, 0
        %992 = vmatprep.subr.bf16.mxu0 0
        %993 = vmatpush1.bf16.msra.mxu0 %v309
        %994 = vmatprep.subr.bf16.mxu0 0
        %995 = vmatpush1.bf16.msra.mxu0 %v310
        %996 = vmatprep.subr.bf16.mxu0 0
        %997 = vmatpush1.bf16.msra.mxu0 0
        %998 = vmatprep.subr.bf16.mxu0 0
        %999 = vmatpush1.bf16.msra.mxu0 0
        %1000 = vmatprep.subr.bf16.mxu0 0
        %1001 = vmatpush1.bf16.msra.mxu0 0
        %1002 = vmatprep.subr.bf16.mxu0 0
        %1003 = vmatpush1.bf16.msra.mxu0 0
        %1004 = vmatprep.subr.bf16.mxu0 0
        %1005 = vmatpush1.bf16.msra.mxu0 0
        %1006 = vmatprep.subr.bf16.mxu0 0
        %1007 = vmatpush1.bf16.msra.mxu0 0
        %1008 = vmatprep.subr.bf16.mxu0 0
        %1009 = vmatpush1.bf16.msra.mxu0 0
        %1010 = vmatprep.subr.bf16.mxu0 0
        %1011 = vmatpush1.bf16.msra.mxu0 0
        %1012 = vmatprep.subr.bf16.mxu0 0
        %1013 = vmatpush1.bf16.msra.mxu0 0
        %1014 = vmatprep.subr.bf16.mxu0 0
        %1015 = vmatpush1.bf16.msra.mxu0 0
        %1016 = vmatprep.subr.bf16.mxu0 0
        %1017 = vmatpush1.bf16.msra.mxu0 0
        %1018 = vmatprep.subr.bf16.mxu0 0
        %1019 = vmatpush1.bf16.msra.mxu0 0
        %1020 = vmatprep.subr.bf16.mxu0 0
        %1021 = vmatpush1.bf16.msra.mxu0 0
        %1022 = vmatprep.subr.bf16.mxu0 0
        %1023 = vmatpush1.bf16.msra.mxu0 0
        %1024 = vmatprep.mubr.bf16.mxu0 0
        %1025 = vmatmul.mubr.bf16.gmra.mrb[0].mxu0 %v990
        %v1026 = vpop.f32.mrb[0].mxu0
        %v1027 = vadd.f32 0.0, %v1026
        %v1028 = vpop.f32.mrb[0].mxu0
        %v1029 = vpop.f32.mrb[0].mxu0
        %v1030 = vpop.f32.mrb[0].mxu0
        %1031 = vdwg.mxu0
        %v1032 = vadd.f32 %v294, %v1027
        %v1033 = vmul.f32 %v1032, 0.5
        %v1034 = vsel %vm201, %v1032, %v1033
        %v1035 = vtanh.pop %v1034
        %v1036 = vmul.f32 %v1035, 0.5
        %v1037 = vadd.f32 %v1036, 0.5
        %v1038 = vsel %vm201, %v1035, %v1037
        %v1039 = vmul.f32 %v1038, %v902
        %1041 = vrot.lane.b32.xlu0 %v1038, 64
        %v1042 = vpop.permute.xlu0 %1041
        %v1044 = vmul.f32 %v1038, %v1042
        %1046 = vrot.lane.b32.xlu0 %v1044, 32
        %v1047 = vpop.permute.xlu0 %1046
        %v1049 = vadd.f32 %v1039, %v1047
        %v1050 = vtanh.pop %v1049
        %1052 = vrot.lane.b32.xlu0 %v1050, 64
        %v1053 = vpop.permute.xlu0 %1052
        %v1055 = vmul.f32 %v1038, %v1053
        %1057 = vrot.lane.b32.xlu0 %v908, 32
        %v1058 = vpop.permute.xlu0 %1057
        %1061 = vrot.lane.b32.xlu0 %v984, 64
        %v1062 = vpop.permute.xlu0 %1061
        %v1064 = vsel %vm227, %v1058, %v1062
        %v1065 = vpack.c.bf16 %v1064, %v1064
        %v1067 = vsel %vm477, %v1065, 0
        %1069 = vmatprep.subr.bf16.mxu0 0
        %1070 = vmatpush1.bf16.msra.mxu0 %v321
        %1071 = vmatprep.subr.bf16.mxu0 0
        %1072 = vmatpush1.bf16.msra.mxu0 %v322
        %1073 = vmatprep.subr.bf16.mxu0 0
        %1074 = vmatpush1.bf16.msra.mxu0 %v323
        %1075 = vmatprep.subr.bf16.mxu0 0
        %1076 = vmatpush1.bf16.msra.mxu0 %v324
        %1077 = vmatprep.subr.bf16.mxu0 0
        %1078 = vmatpush1.bf16.msra.mxu0 0
        %1079 = vmatprep.subr.bf16.mxu0 0
        %1080 = vmatpush1.bf16.msra.mxu0 0
        %1081 = vmatprep.subr.bf16.mxu0 0
        %1082 = vmatpush1.bf16.msra.mxu0 0
        %1083 = vmatprep.subr.bf16.mxu0 0
        %1084 = vmatpush1.bf16.msra.mxu0 0
        %1085 = vmatprep.subr.bf16.mxu0 0
        %1086 = vmatpush1.bf16.msra.mxu0 0
        %1087 = vmatprep.subr.bf16.mxu0 0
        %1088 = vmatpush1.bf16.msra.mxu0 0
        %1089 = vmatprep.subr.bf16.mxu0 0
        %1090 = vmatpush1.bf16.msra.mxu0 0
        %1091 = vmatprep.subr.bf16.mxu0 0
        %1092 = vmatpush1.bf16.msra.mxu0 0
        %1093 = vmatprep.subr.bf16.mxu0 0
        %1094 = vmatpush1.bf16.msra.mxu0 0
        %1095 = vmatprep.subr.bf16.mxu0 0
        %1096 = vmatpush1.bf16.msra.mxu0 0
        %1097 = vmatprep.subr.bf16.mxu0 0
        %1098 = vmatpush1.bf16.msra.mxu0 0
        %1099 = vmatprep.subr.bf16.mxu0 0
        %1100 = vmatpush1.bf16.msra.mxu0 0
        %1101 = vmatprep.mubr.bf16.mxu0 0
        %1102 = vmatmul.mubr.bf16.gmra.mrb[0].mxu0 %v1067
        %v1103 = vpop.f32.mrb[0].mxu0
        %v1104 = vadd.f32 %v475, %v1103
        %v1105 = vpop.f32.mrb[0].mxu0
        %v1106 = vpop.f32.mrb[0].mxu0
        %v1107 = vpop.f32.mrb[0].mxu0
        %1108 = vdwg.mxu0
        %v1109 = vmul.f32 %v1104, 0.5
        %v1110 = vsel %vm201, %v1104, %v1109
        %v1111 = vtanh.pop %v1110
        %v1112 = vmul.f32 %v1111, 0.5
        %v1113 = vadd.f32 %v1112, 0.5
        %v1114 = vsel %vm201, %v1111, %v1113
        %v1115 = vmul.f32 %v1114, %v978
        %1117 = vrot.lane.b32.xlu0 %v1114, 64
        %v1118 = vpop.permute.xlu0 %1117
        %v1120 = vmul.f32 %v1114, %v1118
        %1122 = vrot.lane.b32.xlu0 %v1120, 32
        %v1123 = vpop.permute.xlu0 %1122
        %v1125 = vadd.f32 %v1115, %v1123
        %v1126 = vtanh.pop %v1125
        %1128 = vrot.lane.b32.xlu0 %v1126, 64
        %v1129 = vpop.permute.xlu0 %1128
        %v1131 = vmul.f32 %v1114, %v1129
        %v1132 = vpack.c.bf16 %v1055, %v1055
        %1134 = vrot.lane.b32.xlu0 %v1132, 32
        %v1135 = vpop.permute.xlu0 %1134
        %v1137 = vsel %vm227, %v1135, 0
        %1139 = vmatprep.subr.bf16.mxu0 0
        %1140 = vmatpush1.bf16.msra.mxu0 %v309
        %1141 = vmatprep.subr.bf16.mxu0 0
        %1142 = vmatpush1.bf16.msra.mxu0 %v310
        %1143 = vmatprep.subr.bf16.mxu0 0
        %1144 = vmatpush1.bf16.msra.mxu0 0
        %1145 = vmatprep.subr.bf16.mxu0 0
        %1146 = vmatpush1.bf16.msra.mxu0 0
        %1147 = vmatprep.subr.bf16.mxu0 0
        %1148 = vmatpush1.bf16.msra.mxu0 0
        %1149 = vmatprep.subr.bf16.mxu0 0
        %1150 = vmatpush1.bf16.msra.mxu0 0
        %1151 = vmatprep.subr.bf16.mxu0 0
        %1152 = vmatpush1.bf16.msra.mxu0 0
        %1153 = vmatprep.subr.bf16.mxu0 0
        %1154 = vmatpush1.bf16.msra.mxu0 0
        %1155 = vmatprep.subr.bf16.mxu0 0
        %1156 = vmatpush1.bf16.msra.mxu0 0
        %1157 = vmatprep.subr.bf16.mxu0 0
        %1158 = vmatpush1.bf16.msra.mxu0 0
        %1159 = vmatprep.subr.bf16.mxu0 0
        %1160 = vmatpush1.bf16.msra.mxu0 0
        %1161 = vmatprep.subr.bf16.mxu0 0
        %1162 = vmatpush1.bf16.msra.mxu0 0
        %1163 = vmatprep.subr.bf16.mxu0 0
        %1164 = vmatpush1.bf16.msra.mxu0 0
        %1165 = vmatprep.subr.bf16.mxu0 0
        %1166 = vmatpush1.bf16.msra.mxu0 0
        %1167 = vmatprep.subr.bf16.mxu0 0
        %1168 = vmatpush1.bf16.msra.mxu0 0
        %1169 = vmatprep.subr.bf16.mxu0 0
        %1170 = vmatpush1.bf16.msra.mxu0 0
        %1171 = vmatprep.mubr.bf16.mxu0 0
        %1172 = vmatmul.mubr.bf16.gmra.mrb[0].mxu0 %v1137
        %v1173 = vpop.f32.mrb[0].mxu0
        %v1174 = vadd.f32 0.0, %v1173
        %v1175 = vpop.f32.mrb[0].mxu0
        %v1176 = vpop.f32.mrb[0].mxu0
        %v1177 = vpop.f32.mrb[0].mxu0
        %1178 = vdwg.mxu0
        %v1179 = vadd.f32 %v299, %v1174
        %v1180 = vmul.f32 %v1179, 0.5
        %v1181 = vsel %vm201, %v1179, %v1180
        %v1182 = vtanh.pop %v1181
        %v1183 = vmul.f32 %v1182, 0.5
        %v1184 = vadd.f32 %v1183, 0.5
        %v1185 = vsel %vm201, %v1182, %v1184
        %v1186 = vmul.f32 %v1185, %v1049
        %1188 = vrot.lane.b32.xlu0 %v1185, 64
        %v1189 = vpop.permute.xlu0 %1188
        %v1191 = vmul.f32 %v1185, %v1189
        %1193 = vrot.lane.b32.xlu0 %v1191, 32
        %v1194 = vpop.permute.xlu0 %1193
        %v1196 = vadd.f32 %v1186, %v1194
        %v1197 = vtanh.pop %v1196
        %1199 = vrot.lane.b32.xlu0 %v1197, 64
        %v1200 = vpop.permute.xlu0 %1199
        %v1202 = vmul.f32 %v1185, %v1200
        %1204 = vrot.lane.b32.xlu0 %v1055, 32
        %v1205 = vpop.permute.xlu0 %1204
        %1208 = vrot.lane.b32.xlu0 %v1131, 64
        %v1209 = vpop.permute.xlu0 %1208
        %v1211 = vsel %vm227, %v1205, %v1209
        %v1212 = vpack.c.bf16 %v1211, %v1211
        %v1214 = vsel %vm477, %v1212, 0
        %1216 = vmatprep.subr.bf16.mxu0 0
        %1217 = vmatpush1.bf16.msra.mxu0 %v321
        %1218 = vmatprep.subr.bf16.mxu0 0
        %1219 = vmatpush1.bf16.msra.mxu0 %v322
        %1220 = vmatprep.subr.bf16.mxu0 0
        %1221 = vmatpush1.bf16.msra.mxu0 %v323
        %1222 = vmatprep.subr.bf16.mxu0 0
        %1223 = vmatpush1.bf16.msra.mxu0 %v324
        %1224 = vmatprep.subr.bf16.mxu0 0
        %1225 = vmatpush1.bf16.msra.mxu0 0
        %1226 = vmatprep.subr.bf16.mxu0 0
        %1227 = vmatpush1.bf16.msra.mxu0 0
        %1228 = vmatprep.subr.bf16.mxu0 0
        %1229 = vmatpush1.bf16.msra.mxu0 0
        %1230 = vmatprep.subr.bf16.mxu0 0
        %1231 = vmatpush1.bf16.msra.mxu0 0
        %1232 = vmatprep.subr.bf16.mxu0 0
        %1233 = vmatpush1.bf16.msra.mxu0 0
        %1234 = vmatprep.subr.bf16.mxu0 0
        %1235 = vmatpush1.bf16.msra.mxu0 0
        %1236 = vmatprep.subr.bf16.mxu0 0
        %1237 = vmatpush1.bf16.msra.mxu0 0
        %1238 = vmatprep.subr.bf16.mxu0 0
        %1239 = vmatpush1.bf16.msra.mxu0 0
        %1240 = vmatprep.subr.bf16.mxu0 0
        %1241 = vmatpush1.bf16.msra.mxu0 0
        %1242 = vmatprep.subr.bf16.mxu0 0
        %1243 = vmatpush1.bf16.msra.mxu0 0
        %1244 = vmatprep.subr.bf16.mxu0 0
        %1245 = vmatpush1.bf16.msra.mxu0 0
        %1246 = vmatprep.subr.bf16.mxu0 0
        %1247 = vmatpush1.bf16.msra.mxu0 0
        %1248 = vmatprep.mubr.bf16.mxu0 0
        %1249 = vmatmul.mubr.bf16.gmra.mrb[0].mxu0 %v1214
        %v1250 = vpop.f32.mrb[0].mxu0
        %v1251 = vadd.f32 %v475, %v1250
        %v1252 = vpop.f32.mrb[0].mxu0
        %v1253 = vpop.f32.mrb[0].mxu0
        %v1254 = vpop.f32.mrb[0].mxu0
        %1255 = vdwg.mxu0
        %v1256 = vmul.f32 %v1251, 0.5
        %v1257 = vsel %vm201, %v1251, %v1256
        %v1258 = vtanh.pop %v1257
        %v1259 = vmul.f32 %v1258, 0.5
        %v1260 = vadd.f32 %v1259, 0.5
        %v1261 = vsel %vm201, %v1258, %v1260
        %v1262 = vmul.f32 %v1261, %v1125
        %1264 = vrot.lane.b32.xlu0 %v1261, 64
        %v1265 = vpop.permute.xlu0 %1264
        %v1267 = vmul.f32 %v1261, %v1265
        %1269 = vrot.lane.b32.xlu0 %v1267, 32
        %v1270 = vpop.permute.xlu0 %1269
        %v1272 = vadd.f32 %v1262, %v1270
        %v1273 = vtanh.pop %v1272
        %1275 = vrot.lane.b32.xlu0 %v1273, 64
        %v1276 = vpop.permute.xlu0 %1275
        %v1278 = vmul.f32 %v1261, %v1276
        %v1279 = vpack.c.bf16 %v1202, %v1202
        %1281 = vrot.lane.b32.xlu0 %v1279, 32
        %v1282 = vpop.permute.xlu0 %1281
        %v1284 = vsel %vm227, %v1282, 0
        %1286 = vmatprep.subr.bf16.mxu0 0
        %1287 = vmatpush1.bf16.msra.mxu0 %v309
        %1288 = vmatprep.subr.bf16.mxu0 0
        %1289 = vmatpush1.bf16.msra.mxu0 %v310
        %1290 = vmatprep.subr.bf16.mxu0 0
        %1291 = vmatpush1.bf16.msra.mxu0 0
        %1292 = vmatprep.subr.bf16.mxu0 0
        %1293 = vmatpush1.bf16.msra.mxu0 0
        %1294 = vmatprep.subr.bf16.mxu0 0
        %1295 = vmatpush1.bf16.msra.mxu0 0
        %1296 = vmatprep.subr.bf16.mxu0 0
        %1297 = vmatpush1.bf16.msra.mxu0 0
        %1298 = vmatprep.subr.bf16.mxu0 0
        %1299 = vmatpush1.bf16.msra.mxu0 0
        %1300 = vmatprep.subr.bf16.mxu0 0
        %1301 = vmatpush1.bf16.msra.mxu0 0
        %1302 = vmatprep.subr.bf16.mxu0 0
        %1303 = vmatpush1.bf16.msra.mxu0 0
        %1304 = vmatprep.subr.bf16.mxu0 0
        %1305 = vmatpush1.bf16.msra.mxu0 0
        %1306 = vmatprep.subr.bf16.mxu0 0
        %1307 = vmatpush1.bf16.msra.mxu0 0
        %1308 = vmatprep.subr.bf16.mxu0 0
        %1309 = vmatpush1.bf16.msra.mxu0 0
        %1310 = vmatprep.subr.bf16.mxu0 0
        %1311 = vmatpush1.bf16.msra.mxu0 0
        %1312 = vmatprep.subr.bf16.mxu0 0
        %1313 = vmatpush1.bf16.msra.mxu0 0
        %1314 = vmatprep.subr.bf16.mxu0 0
        %1315 = vmatpush1.bf16.msra.mxu0 0
        %1316 = vmatprep.subr.bf16.mxu0 0
        %1317 = vmatpush1.bf16.msra.mxu0 0
        %1318 = vmatprep.mubr.bf16.mxu0 0
        %1319 = vmatmul.mubr.bf16.gmra.mrb[0].mxu0 %v1284
        %v1320 = vpop.f32.mrb[0].mxu0
        %v1321 = vadd.f32 0.0, %v1320
        %v1322 = vpop.f32.mrb[0].mxu0
        %v1323 = vpop.f32.mrb[0].mxu0
        %v1324 = vpop.f32.mrb[0].mxu0
        %1325 = vdwg.mxu0
        %v1326 = vadd.f32 %v302, %v1321
        %v1327 = vmul.f32 %v1326, 0.5
        %v1328 = vsel %vm201, %v1326, %v1327
        %v1329 = vtanh.pop %v1328
        %v1330 = vmul.f32 %v1329, 0.5
        %v1331 = vadd.f32 %v1330, 0.5
        %v1332 = vsel %vm201, %v1329, %v1331
        %v1333 = vmul.f32 %v1332, %v1196
        %1335 = vrot.lane.b32.xlu0 %v1332, 64
        %v1336 = vpop.permute.xlu0 %1335
        %v1338 = vmul.f32 %v1332, %v1336
        %1340 = vrot.lane.b32.xlu0 %v1338, 32
        %v1341 = vpop.permute.xlu0 %1340
        %v1343 = vadd.f32 %v1333, %v1341
        %v1344 = vtanh.pop %v1343
        %1346 = vrot.lane.b32.xlu0 %v1344, 64
        %v1347 = vpop.permute.xlu0 %1346
        %v1349 = vmul.f32 %v1332, %v1347
        %1351 = vrot.lane.b32.xlu0 %v1202, 32
        %v1352 = vpop.permute.xlu0 %1351
        %1355 = vrot.lane.b32.xlu0 %v1278, 64
        %v1356 = vpop.permute.xlu0 %1355
        %v1358 = vsel %vm227, %v1352, %v1356
        %v1359 = vpack.c.bf16 %v1358, %v1358
        %v1361 = vsel %vm477, %v1359, 0
        %1363 = vmatprep.subr.bf16.mxu0 0
        %1364 = vmatpush1.bf16.msra.mxu0 %v321
        %1365 = vmatprep.subr.bf16.mxu0 0
        %1366 = vmatpush1.bf16.msra.mxu0 %v322
        %1367 = vmatprep.subr.bf16.mxu0 0
        %1368 = vmatpush1.bf16.msra.mxu0 %v323
        %1369 = vmatprep.subr.bf16.mxu0 0
        %1370 = vmatpush1.bf16.msra.mxu0 %v324
        %1371 = vmatprep.subr.bf16.mxu0 0
        %1372 = vmatpush1.bf16.msra.mxu0 0
        %1373 = vmatprep.subr.bf16.mxu0 0
        %1374 = vmatpush1.bf16.msra.mxu0 0
        %1375 = vmatprep.subr.bf16.mxu0 0
        %1376 = vmatpush1.bf16.msra.mxu0 0
        %1377 = vmatprep.subr.bf16.mxu0 0
        %1378 = vmatpush1.bf16.msra.mxu0 0
        %1379 = vmatprep.subr.bf16.mxu0 0
        %1380 = vmatpush1.bf16.msra.mxu0 0
        %1381 = vmatprep.subr.bf16.mxu0 0
        %1382 = vmatpush1.bf16.msra.mxu0 0
        %1383 = vmatprep.subr.bf16.mxu0 0
        %1384 = vmatpush1.bf16.msra.mxu0 0
        %1385 = vmatprep.subr.bf16.mxu0 0
        %1386 = vmatpush1.bf16.msra.mxu0 0
        %1387 = vmatprep.subr.bf16.mxu0 0
        %1388 = vmatpush1.bf16.msra.mxu0 0
        %1389 = vmatprep.subr.bf16.mxu0 0
        %1390 = vmatpush1.bf16.msra.mxu0 0
        %1391 = vmatprep.subr.bf16.mxu0 0
        %1392 = vmatpush1.bf16.msra.mxu0 0
        %1393 = vmatprep.subr.bf16.mxu0 0
        %1394 = vmatpush1.bf16.msra.mxu0 0
        %1395 = vmatprep.mubr.bf16.mxu0 0
        %1396 = vmatmul.mubr.bf16.gmra.mrb[0].mxu0 %v1361
        %v1397 = vpop.f32.mrb[0].mxu0
        %v1398 = vadd.f32 %v475, %v1397
        %v1399 = vpop.f32.mrb[0].mxu0
        %v1400 = vpop.f32.mrb[0].mxu0
        %v1401 = vpop.f32.mrb[0].mxu0
        %1402 = vdwg.mxu0
        %v1403 = vmul.f32 %v1398, 0.5
        %v1404 = vsel %vm201, %v1398, %v1403
        %v1405 = vtanh.pop %v1404
        %v1406 = vmul.f32 %v1405, 0.5
        %v1407 = vadd.f32 %v1406, 0.5
        %v1408 = vsel %vm201, %v1405, %v1407
        %v1409 = vmul.f32 %v1408, %v1272
        %1411 = vrot.lane.b32.xlu0 %v1408, 64
        %v1412 = vpop.permute.xlu0 %1411
        %v1414 = vmul.f32 %v1408, %v1412
        %1416 = vrot.lane.b32.xlu0 %v1414, 32
        %v1417 = vpop.permute.xlu0 %1416
        %v1419 = vadd.f32 %v1409, %v1417
        %v1420 = vtanh.pop %v1419
        %1422 = vrot.lane.b32.xlu0 %v1420, 64
        %v1423 = vpop.permute.xlu0 %1422
        %v1425 = vmul.f32 %v1408, %v1423
        %1427 = vrot.lane.b32.xlu0 %v1349, 32
        %v1428 = vpop.permute.xlu0 %1427
        %1431 = vrot.lane.b32.xlu0 %v1425, 64
        %v1432 = vpop.permute.xlu0 %1431
        %v1434 = vsel %vm227, %v1428, %v1432
        %v1435 = vpack.c.bf16 %v1434, %v1434
        %v1437 = vsel %vm477, %v1435, 0
        %1439 = vmatprep.subr.bf16.mxu0 0
        %1440 = vmatpush1.bf16.msra.mxu0 %v321
        %1441 = vmatprep.subr.bf16.mxu0 0
        %1442 = vmatpush1.bf16.msra.mxu0 %v322
        %1443 = vmatprep.subr.bf16.mxu0 0
        %1444 = vmatpush1.bf16.msra.mxu0 %v323
        %1445 = vmatprep.subr.bf16.mxu0 0
        %1446 = vmatpush1.bf16.msra.mxu0 %v324
        %1447 = vmatprep.subr.bf16.mxu0 0
        %1448 = vmatpush1.bf16.msra.mxu0 0
        %1449 = vmatprep.subr.bf16.mxu0 0
        %1450 = vmatpush1.bf16.msra.mxu0 0
        %1451 = vmatprep.subr.bf16.mxu0 0
        %1452 = vmatpush1.bf16.msra.mxu0 0
        %1453 = vmatprep.subr.bf16.mxu0 0
        %1454 = vmatpush1.bf16.msra.mxu0 0
        %1455 = vmatprep.subr.bf16.mxu0 0
        %1456 = vmatpush1.bf16.msra.mxu0 0
        %1457 = vmatprep.subr.bf16.mxu0 0
        %1458 = vmatpush1.bf16.msra.mxu0 0
        %1459 = vmatprep.subr.bf16.mxu0 0
        %1460 = vmatpush1.bf16.msra.mxu0 0
        %1461 = vmatprep.subr.bf16.mxu0 0
        %1462 = vmatpush1.bf16.msra.mxu0 0
        %1463 = vmatprep.subr.bf16.mxu0 0
        %1464 = vmatpush1.bf16.msra.mxu0 0
        %1465 = vmatprep.subr.bf16.mxu0 0
        %1466 = vmatpush1.bf16.msra.mxu0 0
        %1467 = vmatprep.subr.bf16.mxu0 0
        %1468 = vmatpush1.bf16.msra.mxu0 0
        %1469 = vmatprep.subr.bf16.mxu0 0
        %1470 = vmatpush1.bf16.msra.mxu0 0
        %1471 = vmatprep.mubr.bf16.mxu0 0
        %1472 = vmatmul.mubr.bf16.gmra.mrb[0].mxu0 %v1437
        %v1473 = vpop.f32.mrb[0].mxu0
        %v1474 = vadd.f32 %v475, %v1473
        %v1475 = vpop.f32.mrb[0].mxu0
        %v1476 = vpop.f32.mrb[0].mxu0
        %v1477 = vpop.f32.mrb[0].mxu0
        %1478 = vdwg.mxu0
        %v1479 = vmul.f32 %v1474, 0.5
        %v1480 = vsel %vm201, %v1474, %v1479
        %v1481 = vtanh.pop %v1480
        %v1482 = vmul.f32 %v1481, 0.5
        %v1483 = vadd.f32 %v1482, 0.5
        %v1484 = vsel %vm201, %v1481, %v1483
        %v1485 = vmul.f32 %v1484, %v1419
        %1487 = vrot.lane.b32.xlu0 %v1484, 64
        %v1488 = vpop.permute.xlu0 %1487
        %v1490 = vmul.f32 %v1484, %v1488
        %1492 = vrot.lane.b32.xlu0 %v1490, 32
        %v1493 = vpop.permute.xlu0 %1492
        %v1495 = vadd.f32 %v1485, %v1493
        %v1496 = vtanh.pop %v1495
        %1498 = vrot.lane.b32.xlu0 %v1496, 64
        %v1499 = vpop.permute.xlu0 %1498
        %v1501 = vmul.f32 %v1484, %v1499
        %1503 = vrot.lane.b32.xlu0 %v1501, 32
        %v1504 = vpop.permute.xlu0 %1503
        %1506 = vst.msk [vmem:[%s190] sm:$0xff] %vm227, %v1504
        %s1507 = sand.u32 %s115, 1
        %s1508 = scalar_lea.sflag [#allocation3], %s1507
        %s1509 = sand.u32 %s115, 1
        %s1510 = smul.addr %s1509, 8
        %s1511 = scalar_lea.vmem [#allocation2], %s1510
        // Predicated region
        $region37: #{tpu_custom_call.1} parent=35 // pred_check
          %p1512 = pneg %p125
        $region38: #{tpu_custom_call.1} parent=35 // pred_check_branch
          %1514 = sbr.rel (%p1512) target = $region40
        $region39: #{tpu_custom_call.1} parent=35 // pred_region
          %s1516 = ssub.s32 128, 128
          %1517 = vsyncadd %s1508, %s1516
          %s1518 = smul.addr %s18, 128
          %s1519 = scalar_lea.hbm %s4, %s1518
          %s1521 = sshll.u32 %s1511, 4
          %s1522 = int_to_ptr.vmem [resolvable:$true] %s1521
          %1524 = dma.vmem_to_hbm [thread:$0]  %s1522, 128, %s1519, %s1508
        $region40: #{tpu_custom_call.1} parent=35 // pred_fallthru
          _
      $region36: #{tpu_custom_call.1} parent=5 // pred_fallthru
        _
      %p1525 = scmp.le.s32.totalorder 2, %s13
      // Predicated region
      $region41: #{tpu_custom_call.1} parent=5 // pred_check
        %p1526 = pneg %p1525
      $region42: #{tpu_custom_call.1} parent=5 // pred_check_branch
        %1528 = sbr.rel (%p1526) target = $region44
      $region43: #{tpu_custom_call.1} parent=5 // pred_region
        %s1529 = ssub.s32 %s13, 2
        // Predicated region
        $region45: #{tpu_custom_call.1} parent=43 // pred_check
          %p1530 = pneg %p131
        $region46: #{tpu_custom_call.1} parent=43 // pred_check_branch
          %1532 = sbr.rel (%p1530) target = $region48
        $region47: #{tpu_custom_call.1} parent=43 // pred_region
          %s1533 = sand.u32 %s116, 1
          %s1534 = scalar_lea.sflag [#allocation3], %s1533
          %s1535 = sand.u32 %s116, 1
          %s1536 = smul.addr %s1535, 8
          %s1537 = scalar_lea.vmem [#allocation2], %s1536
          %1538 = dma.done %s1534, 128
        $region48: #{tpu_custom_call.1} parent=43 // pred_fallthru
          _
      $region44: #{tpu_custom_call.1} parent=5 // pred_fallthru
        _
    $region6: #{tpu_custom_call.1} parent=1 // loop_footer
      %s17 = sadd.s32 1, %s13
    $region7: #{tpu_custom_call.1} parent=1 // loop_footer_branch
      %12 = sbr.rel target = $region3
    $region8: #{tpu_custom_call.1} parent=1 // loop_exit
      _
    %1539 = vsyncpa [#allocation3], 1
    %s1540 = scalar_lea.sflag [#allocation3], 1
    %1541 = vsyncpa %s1540, 1

</llo_original>
